<compile_context>
chip_gen: v6e
topology: v6e:2x2x1
jax: 0.10.0
libtpu: 0.0.40
codegen_flags: <defaults>
</compile_context>

<pallas_src>
import functools
import math

import jax
import jax.numpy as jnp
from jax import lax
from jax.experimental import pallas as pl
from jax.experimental.pallas import tpu as pltpu


# ---------------------------------------------------------------------------
# Helpers
# ---------------------------------------------------------------------------

def _vmem_limit_bytes():
    """Generation-aware VMEM budget: ~3/4 of physical capacity, capped."""
    cap = 64 * 1024 * 1024          # conservative default (v7x per-core VMEM)
    try:
        info = pltpu.get_tpu_info()
        cap = int(getattr(info, "vmem_capacity_bytes", cap))
    except Exception:
        pass
    return min((cap * 3) // 4, 100 * 1024 * 1024)


def _pick_block(size, target, aligns):
    """Largest divisor of `size` that is <= `target` and a multiple of the
    largest feasible alignment in `aligns`; falls back to the full extent
    (a full-array block is always legal)."""
    if size <= target:
        return size
    for a in aligns:
        if target >= a and size % a == 0:
            b = (target // a) * a
            while b >= a:
                if size % b == 0:
                    return b
                b -= a
    return size


def _resident_spec(block_shape, single_buffer):
    """BlockSpec for an input whose block is identical at every grid step
    (weights / biases). With single_buffer=True the useless double buffer is
    dropped (pl.Buffered(1)); falls back cleanly on older JAX versions."""
    index_map = lambda *_: (0,) * len(block_shape)
    if single_buffer:
        try:
            return pl.BlockSpec(block_shape, index_map,
                                pipeline_mode=pl.Buffered(1))
        except TypeError:           # pipeline_mode not supported
            pass
    return pl.BlockSpec(block_shape, index_map)


def _prep_mask(attention_mask, B, S):
    """Normalize `attention_mask` (broadcastable to (B,S,S); 0 == masked) into
    a compact array + kind. Key-padding masks stay (b,1,S) int32; only a
    genuinely dense (..,S,S) mask becomes int8 (b,S,S)."""
    if attention_mask is None:
        return None, None
    m = jnp.asarray(attention_mask) != 0
    if m.ndim == 1:                                   # (S,)
        m = m.reshape(1, 1, S)
    elif m.ndim == 2:
        if m.shape[-2] == S and m.shape[-1] == S:     # (S, S)
            m = m.reshape(1, S, S)
        else:                                         # (B?, S) key padding
            m = m.reshape(m.shape[0], 1, m.shape[1])
    if m.shape[-2] == 1:                              # key padding (b, 1, S)
        return m.astype(jnp.int32), "key"
    return m.astype(jnp.int8), "full"                 # dense (b, S, S)


# ---------------------------------------------------------------------------
# Kernel 1: K / V projection prologue (run once per token)
# ---------------------------------------------------------------------------

def _kv_proj_kernel(x_ref, wk_ref, bk_ref, wv_ref, bv_ref, k_ref, v_ref):
    x = x_ref[0]                                                   # (ts, D) bf16
    # Two back-to-back dots keep only one (ts, D) f32 intermediate live.
    k = jnp.dot(x, wk_ref[...], preferred_element_type=jnp.float32) + bk_ref[...]
    k_ref[0] = k.astype(jnp.bfloat16)
    v = jnp.dot(x, wv_ref[...], preferred_element_type=jnp.float32) + bv_ref[...]
    v_ref[0] = v.astype(jnp.bfloat16)


def _project_kv(x_b, wk_b, bk_f, wv_b, bv_f, *, block_s, vmem_limit):
    B, S, D = x_b.shape
    ts = _pick_block(S, block_s, (256, 128, 8))
    ns = S // ts

    def _run(single_buffer):
        return pl.pallas_call(
            _kv_proj_kernel,
            out_shape=(jax.ShapeDtypeStruct((B, S, D), jnp.bfloat16),
                       jax.ShapeDtypeStruct((B, S, D), jnp.bfloat16)),
            grid_spec=pltpu.PrefetchScalarGridSpec(
                num_scalar_prefetch=0,
                grid=(B, ns),
                in_specs=[
                    pl.BlockSpec((1, ts, D), lambda b, si: (b, si, 0)),
                    _resident_spec((D, D), single_buffer),
                    _resident_spec((1, D), single_buffer),
                    _resident_spec((D, D), single_buffer),
                    _resident_spec((1, D), single_buffer),
                ],
                out_specs=(
                    pl.BlockSpec((1, ts, D), lambda b, si: (b, si, 0)),
                    pl.BlockSpec((1, ts, D), lambda b, si: (b, si, 0)),
                ),
            ),
            compiler_params=pltpu.CompilerParams(
                dimension_semantics=("parallel", "parallel"),
                vmem_limit_bytes=vmem_limit,
            ),
        )(x_b, wk_b, bk_f, wv_b, bv_f)

    try:
        return _run(True)
    except Exception:   # e.g. Buffered(1) rejected by this Mosaic version
        return _run(False)


# ---------------------------------------------------------------------------
# Kernel 2: flash attention with fused Q projection and output projection
# ---------------------------------------------------------------------------

def _attention_kernel(*refs, has_mask):
    if has_mask:
        (x_q_ref, k_ref, v_ref, mask_ref,
         wq_ref, bq_ref, wo_ref, bo_ref,
         o_ref, q_sc, m_sc, l_sc, acc_sc) = refs
    else:
        (x_q_ref, k_ref, v_ref,
         wq_ref, bq_ref, wo_ref, bo_ref,
         o_ref, q_sc, m_sc, l_sc, acc_sc) = refs
        mask_ref = None

    ki = pl.program_id(2)

    # --- per-(batch, q-block) init: project Q once (scale already folded into
    #     Wq/bq on the host), reset online-softmax state.
    @pl.when(ki == 0)
    def _():
        xq = x_q_ref[0]                                            # (tq, D) bf16
        q = jnp.dot(xq, wq_ref[...],
                    preferred_element_type=jnp.float32) + bq_ref[...]
        q_sc[...] = q.astype(jnp.bfloat16)
        m_sc[...] = jnp.full_like(m_sc, -jnp.inf)
        l_sc[...] = jnp.zeros_like(l_sc)
        acc_sc[...] = jnp.zeros_like(acc_sc)

    k = k_ref[0]                                                   # (tkv, D) bf16
    v = v_ref[0]                                                   # (tkv, D) bf16

    # --- scores: contract the minor dim of both operands (q @ k^T, no k.T).
    s = lax.dot_general(q_sc[...], k,
                        dimension_numbers=(((1,), (1,)), ((), ())),
                        preferred_element_type=jnp.float32)        # (tq, tkv)

    if has_mask:
        # mask tile is (tq, tkv) int8 (dense) or (1, tkv) int32 (key padding);
        # both broadcast against s.
        s = jnp.where(mask_ref[0] == 0, jnp.float32(-1e20), s)

    # --- online softmax update (flash-style).
    m_prev = m_sc[...]
    m_new = jnp.maximum(m_prev, jnp.max(s, axis=-1, keepdims=True))
    alpha = jnp.exp(m_prev - m_new)
    p = jnp.exp(s - m_new)
    l_sc[...] = alpha * l_sc[...] + jnp.sum(p, axis=-1, keepdims=True)
    acc_sc[...] = alpha * acc_sc[...] + jnp.dot(
        p.astype(jnp.bfloat16), v, preferred_element_type=jnp.float32)
    m_sc[...] = m_new

    # TODO(synk): nn.Dropout on attention weights is identity in eval mode;
    # training-mode dropout (pltpu.prng_*) is not implemented here.

    # --- finalize: normalize (exact reciprocal, runs once per q-block) and
    #     apply the output projection.
    @pl.when(ki == pl.num_programs(2) - 1)
    def _():
        out = acc_sc[...] * pl.reciprocal(l_sc[...], approx=False)  # (tq, D) f32
        ret = jnp.dot(out.astype(jnp.bfloat16), wo_ref[...],
                      preferred_element_type=jnp.float32) + bo_ref[...]
        o_ref[0] = ret.astype(o_ref.dtype)


def self_attention(x, params, attention_mask=None, *,
                   block_q=None, block_kv=None, block_proj=512):
    """x: (B, S, D) float32. attention_mask: optional, broadcastable to
    (B, S, S); entries == 0 are masked out (PyTorch masked_fill semantics).
    Supported mask shapes: (S,), (B,S), (S,S), (B,1,S), (1/B, S, S)."""
    B, S, D = x.shape
    wq, bq, wk, bk, wv, bv, wo, bo = params

    vmem_limit = _vmem_limit_bytes()
    if block_q is None:
        block_q = 256
    if block_kv is None:
        # 128 MiB-VMEM parts (v5e/v6e) can afford bigger kv tiles.
        block_kv = 1024 if vmem_limit >= 80 * 1024 * 1024 else 512

    # tq prefers 256-multiples (v6e/v7x MXU), falls back to 128 / 8; tkv is the
    # minor dim of the score tile so it must be a multiple of 128 (or full S).
    tq = _pick_block(S, block_q, (256, 128, 8))
    # If (batch x q-blocks) cannot feed both v7x TensorCores, shrink tq.
    while B * (S // tq) < 2 and tq > 8 and tq % 2 == 0 and S % (tq // 2) == 0:
        tq //= 2
    tkv = _pick_block(S, block_kv, (256, 128))
    nq, nkv = S // tq, S // tkv

    scale = 1.0 / math.sqrt(float(D))

    # bf16 MXU inputs (halves HBM traffic for x and weights); biases stay f32.
    # The 1/sqrt(D) softmax scale is folded into Wq / bq (free host transform).
    x_b = x.astype(jnp.bfloat16)
    wq_b = (wq * scale).astype(jnp.bfloat16)
    bq_f = (bq * scale).astype(jnp.float32)
    wo_b = wo.astype(jnp.bfloat16)
    bo_f = bo.astype(jnp.float32)

    # --- prologue: project K and V once per token (hoisted out of kv loop).
    k_all, v_all = _project_kv(
        x_b,
        wk.astype(jnp.bfloat16), bk.astype(jnp.float32),
        wv.astype(jnp.bfloat16), bv.astype(jnp.float32),
        block_s=block_proj, vmem_limit=vmem_limit)

    mask, mask_kind = _prep_mask(attention_mask, B, S)
    has_mask = mask is not None

    def _run(single_buffer):
        inputs = [x_b, k_all, v_all]
        in_specs = [
            pl.BlockSpec((1, tq, D), lambda b, qi, ki: (b, qi, 0)),   # x for Q
            pl.BlockSpec((1, tkv, D), lambda b, qi, ki: (b, ki, 0)),  # K
            pl.BlockSpec((1, tkv, D), lambda b, qi, ki: (b, ki, 0)),  # V
        ]
        if has_mask:
            inputs.append(mask)
            bsel = (lambda b: b) if mask.shape[0] == B else (lambda b: 0)
            if mask_kind == "key":
                in_specs.append(pl.BlockSpec(
                    (1, 1, tkv), lambda b, qi, ki: (bsel(b), 0, ki)))
            else:
                in_specs.append(pl.BlockSpec(
                    (1, tq, tkv), lambda b, qi, ki: (bsel(b), qi, ki)))

        inputs += [wq_b, bq_f, wo_b, bo_f]
        in_specs += [
            _resident_spec((D, D), single_buffer),
            _resident_spec((1, D), single_buffer),
            _resident_spec((D, D), single_buffer),
            _resident_spec((1, D), single_buffer),
        ]

        kernel = functools.partial(_attention_kernel, has_mask=has_mask)

        return pl.pallas_call(
            kernel,
            out_shape=jax.ShapeDtypeStruct((B, S, D), x.dtype),
            grid_spec=pltpu.PrefetchScalarGridSpec(
                num_scalar_prefetch=0,
                grid=(B, nq, nkv),
                in_specs=in_specs,
                out_specs=pl.BlockSpec((1, tq, D), lambda b, qi, ki: (b, qi, 0)),
                scratch_shapes=[
                    pltpu.VMEM((tq, D), jnp.bfloat16),   # pre-scaled projected Q
                    pltpu.VMEM((tq, 1), jnp.float32),    # running max m
                    pltpu.VMEM((tq, 1), jnp.float32),    # running denom l
                    pltpu.VMEM((tq, D), jnp.float32),    # output accumulator
                ],
            ),
            compiler_params=pltpu.CompilerParams(
                # (batch, q-block) parallel -> both v7x TensorCores get work;
                # kv-block is the online-softmax reduction axis (must be last).
                dimension_semantics=("parallel", "parallel", "arbitrary"),
                vmem_limit_bytes=vmem_limit,
            ),
        )(*inputs)

    try:
        return _run(True)
    except Exception:   # e.g. Buffered(1) rejected by this Mosaic version
        return _run(False)


# ---------------------------------------------------------------------------
# Parameter init + pure-JAX reference
# ---------------------------------------------------------------------------

def init_params(key, embed_dim):
    """Deterministic parameter init mirroring nn.Linear shapes.

    Weights stored as (D_in, D_out) (already transposed vs PyTorch's
    (out, in)), biases as (1, D_out)."""
    keys = jax.random.split(key, 8)
    bound = 1.0 / math.sqrt(embed_dim)

    def w(k):
        return jax.random.uniform(k, (embed_dim, embed_dim),
                                  minval=-bound, maxval=bound,
                                  dtype=jnp.float32)

    def b(k):
        return jax.random.uniform(k, (1, embed_dim),
                                  minval=-bound, maxval=bound,
                                  dtype=jnp.float32)

    return (w(keys[0]), b(keys[1]),   # query_proj
            w(keys[2]), b(keys[3]),   # key_proj
            w(keys[4]), b(keys[5]),   # value_proj
            w(keys[6]), b(keys[7]))   # output_proj


def self_attention_ref(x, params, attention_mask=None):
    """Pure-JAX f32 reference of the PyTorch forward (dropout in eval mode)."""
    wq, bq, wk, bk, wv, bv, wo, bo = params
    Q = x @ wq + bq
    K = x @ wk + bk
    V = x @ wv + bv
    att = Q @ jnp.swapaxes(K, -1, -2) / math.sqrt(x.shape[-1])
    if attention_mask is not None:
        att = jnp.where(attention_mask == 0, -1e20, att)
    att = jax.nn.softmax(att, axis=-1)
    out = att @ V
    return out @ wo + bo


if __name__ == "__main__":
    key = jax.random.PRNGKey(0)
    k_x, k_p, k_m1, k_m2 = jax.random.split(key, 4)

    # Lane/tile-aligned small shapes; explicit 128 blocks exercise the full
    # (batch, q-block, kv-block) pipeline: attention grid = (2, 2, 2).
    B, S, D = 2, 256, 128
    x = jax.random.normal(k_x, (B, S, D), dtype=jnp.float32)
    params = init_params(k_p, D)

    # (1) dense (B, S, S) mask -- general masked_fill path (int8 tiles).
    full_mask = (jax.random.uniform(k_m1, (B, S, S)) > 0.2).astype(jnp.float32)
    full_mask = full_mask.at[:, :, 0].set(1.0)   # avoid fully-masked rows
    out_full = self_attention(x, params, attention_mask=full_mask,
                              block_q=128, block_kv=128)
    out_full = jax.block_until_ready(out_full)
    ref_full = self_attention_ref(x, params, attention_mask=full_mask)
    assert out_full.shape == (B, S, D)
    err_full = float(jnp.max(jnp.abs(out_full - ref_full)))
    # bf16 MXU inputs + online softmax vs a pure-f32 reference.
    assert jnp.allclose(out_full, ref_full, atol=5e-2, rtol=5e-2), err_full

    # (2) key-padding (B, 1, S) mask -- compact int32 stream, no (B,S,S) blowup.
    key_mask = (jax.random.uniform(k_m2, (B, 1, S)) > 0.3).astype(jnp.float32)
    key_mask = key_mask.at[:, :, 0].set(1.0)     # keep at least one key
    out_key = self_attention(x, params, attention_mask=key_mask,
                             block_q=128, block_kv=128)
    out_key = jax.block_until_ready(out_key)
    ref_key = self_attention_ref(x, params, attention_mask=key_mask)
    err_key = float(jnp.max(jnp.abs(out_key - ref_key)))
    assert jnp.allclose(out_key, ref_key, atol=5e-2, rtol=5e-2), err_key

    print("KERNEL_OK")
</pallas_src>

<mosaic_0001>
module attributes {stable_mosaic.version = 11 : i64} {
  func.func @_kv_proj_kernel(%arg0: i32, %arg1: i32, %arg2: memref<1x256x128xbf16, #tpu.memory_space<vmem>>, %arg3: memref<128x128xbf16, #tpu.memory_space<vmem>>, %arg4: memref<1x128xf32, #tpu.memory_space<vmem>>, %arg5: memref<128x128xbf16, #tpu.memory_space<vmem>>, %arg6: memref<1x128xf32, #tpu.memory_space<vmem>>, %arg7: memref<1x256x128xbf16, #tpu.memory_space<vmem>>, %arg8: memref<1x256x128xbf16, #tpu.memory_space<vmem>>) attributes {dimension_semantics = [#tpu.dimension_semantics<parallel>, #tpu.dimension_semantics<parallel>], iteration_bounds = array<i64: 2, 1>, scalar_prefetch = 0 : i64, scratch_operands = 0 : i64, tpu.core_type = #tpu.core_type<tc>, window_params = [{transform_indices = @transform_0, window_bounds = array<i64: 1, 256, 128>}, {pipeline_mode = #tpu.pipeline_mode<synchronous>, transform_indices = @transform_1, window_bounds = array<i64: 128, 128>}, {pipeline_mode = #tpu.pipeline_mode<synchronous>, transform_indices = @transform_2, window_bounds = array<i64: 1, 128>}, {pipeline_mode = #tpu.pipeline_mode<synchronous>, transform_indices = @transform_3, window_bounds = array<i64: 128, 128>}, {pipeline_mode = #tpu.pipeline_mode<synchronous>, transform_indices = @transform_4, window_bounds = array<i64: 1, 128>}, {transform_indices = @transform_5, window_bounds = array<i64: 1, 256, 128>}, {transform_indices = @transform_6, window_bounds = array<i64: 1, 256, 128>}]} {
    %c0 = arith.constant 0 : index
    %c0_0 = arith.constant 0 : index
    %c0_1 = arith.constant 0 : index
    %0 = vector.load %arg2[%c0, %c0_0, %c0_1] : memref<1x256x128xbf16, #tpu.memory_space<vmem>>, vector<1x256x128xbf16>
    %1 = vector.shape_cast %0 : vector<1x256x128xbf16> to vector<256x128xbf16>
    %c0_2 = arith.constant 0 : index
    %c0_3 = arith.constant 0 : index
    %2 = vector.load %arg3[%c0_2, %c0_3] : memref<128x128xbf16, #tpu.memory_space<vmem>>, vector<128x128xbf16>
    %cst = arith.constant dense<0.000000e+00> : vector<256x128xf32>
    %3 = tpu.matmul %1, %2, %cst {dimension_numbers = #tpu.dot_dimension_numbers<[1], [0], [0], [1], [0, 0, 1, 1], [], []>} : vector<256x128xbf16>, vector<128x128xbf16>, vector<256x128xf32> -> vector<256x128xf32>
    %c0_4 = arith.constant 0 : index
    %c0_5 = arith.constant 0 : index
    %4 = vector.load %arg4[%c0_4, %c0_5] : memref<1x128xf32, #tpu.memory_space<vmem>>, vector<1x128xf32>
    %5 = vector.broadcast %4 : vector<1x128xf32> to vector<256x128xf32>
    %6 = arith.addf %3, %5 : vector<256x128xf32>
    %7 = arith.truncf %6 : vector<256x128xf32> to vector<256x128xbf16>
    %c0_6 = arith.constant 0 : index
    %c0_7 = arith.constant 0 : index
    %c0_8 = arith.constant 0 : index
    %8 = vector.load %arg7[%c0_6, %c0_7, %c0_8] : memref<1x256x128xbf16, #tpu.memory_space<vmem>>, vector<1x256x128xbf16>
    %9 = vector.shape_cast %8 : vector<1x256x128xbf16> to vector<256x128xbf16>
    %10 = vector.shape_cast %7 : vector<256x128xbf16> to vector<1x256x128xbf16>
    tpu.vector_store %arg7[%c0_6, %c0_7, %c0_8], %10 {strides = array<i32>} : memref<1x256x128xbf16, #tpu.memory_space<vmem>>, vector<1x256x128xbf16>,
    %c0_9 = arith.constant 0 : index
    %c0_10 = arith.constant 0 : index
    %11 = vector.load %arg5[%c0_9, %c0_10] : memref<128x128xbf16, #tpu.memory_space<vmem>>, vector<128x128xbf16>
    %cst_11 = arith.constant dense<0.000000e+00> : vector<256x128xf32>
    %12 = tpu.matmul %1, %11, %cst_11 {dimension_numbers = #tpu.dot_dimension_numbers<[1], [0], [0], [1], [0, 0, 1, 1], [], []>} : vector<256x128xbf16>, vector<128x128xbf16>, vector<256x128xf32> -> vector<256x128xf32>
    %c0_12 = arith.constant 0 : index
    %c0_13 = arith.constant 0 : index
    %13 = vector.load %arg6[%c0_12, %c0_13] : memref<1x128xf32, #tpu.memory_space<vmem>>, vector<1x128xf32>
    %14 = vector.broadcast %13 : vector<1x128xf32> to vector<256x128xf32>
    %15 = arith.addf %12, %14 : vector<256x128xf32>
    %16 = arith.truncf %15 : vector<256x128xf32> to vector<256x128xbf16>
    %c0_14 = arith.constant 0 : index
    %c0_15 = arith.constant 0 : index
    %c0_16 = arith.constant 0 : index
    %17 = vector.load %arg8[%c0_14, %c0_15, %c0_16] : memref<1x256x128xbf16, #tpu.memory_space<vmem>>, vector<1x256x128xbf16>
    %18 = vector.shape_cast %17 : vector<1x256x128xbf16> to vector<256x128xbf16>
    %19 = vector.shape_cast %16 : vector<256x128xbf16> to vector<1x256x128xbf16>
    tpu.vector_store %arg8[%c0_14, %c0_15, %c0_16], %19 {strides = array<i32>} : memref<1x256x128xbf16, #tpu.memory_space<vmem>>, vector<1x256x128xbf16>,
    return
  }
  func.func @transform_0(%arg0: i32, %arg1: i32) -> (i32, i32, i32) {
    %c0_i32 = arith.constant 0 : i32
    %c0_i32_0 = arith.constant 0 : i32
    return %arg0, %arg1, %c0_i32 : i32, i32, i32
  }
  func.func @transform_1(%arg0: i32, %arg1: i32) -> (i32, i32) {
    %c0_i32 = arith.constant 0 : i32
    %c0_i32_0 = arith.constant 0 : i32
    %c0_i32_1 = arith.constant 0 : i32
    return %c0_i32, %c0_i32_0 : i32, i32
  }
  func.func @transform_2(%arg0: i32, %arg1: i32) -> (i32, i32) {
    %c0_i32 = arith.constant 0 : i32
    %c0_i32_0 = arith.constant 0 : i32
    %c0_i32_1 = arith.constant 0 : i32
    return %c0_i32, %c0_i32_0 : i32, i32
  }
  func.func @transform_3(%arg0: i32, %arg1: i32) -> (i32, i32) {
    %c0_i32 = arith.constant 0 : i32
    %c0_i32_0 = arith.constant 0 : i32
    %c0_i32_1 = arith.constant 0 : i32
    return %c0_i32, %c0_i32_0 : i32, i32
  }
  func.func @transform_4(%arg0: i32, %arg1: i32) -> (i32, i32) {
    %c0_i32 = arith.constant 0 : i32
    %c0_i32_0 = arith.constant 0 : i32
    %c0_i32_1 = arith.constant 0 : i32
    return %c0_i32, %c0_i32_0 : i32, i32
  }
  func.func @transform_5(%arg0: i32, %arg1: i32) -> (i32, i32, i32) {
    %c0_i32 = arith.constant 0 : i32
    %c0_i32_0 = arith.constant 0 : i32
    return %arg0, %arg1, %c0_i32 : i32, i32, i32
  }
  func.func @transform_6(%arg0: i32, %arg1: i32) -> (i32, i32, i32) {
    %c0_i32 = arith.constant 0 : i32
    %c0_i32_0 = arith.constant 0 : i32
    return %arg0, %arg1, %c0_i32 : i32, i32, i32
  }
}

module attributes {stable_mosaic.version = 11 : i64} {
  func.func @_kv_proj_kernel(%arg0: i32, %arg1: i32, %arg2: memref<1x256x128xbf16, #tpu.memory_space<vmem>>, %arg3: memref<128x128xbf16, #tpu.memory_space<vmem>>, %arg4: memref<1x128xf32, #tpu.memory_space<vmem>>, %arg5: memref<128x128xbf16, #tpu.memory_space<vmem>>, %arg6: memref<1x128xf32, #tpu.memory_space<vmem>>, %arg7: memref<1x256x128xbf16, #tpu.memory_space<vmem>>, %arg8: memref<1x256x128xbf16, #tpu.memory_space<vmem>>) attributes {dimension_semantics = [#tpu.dimension_semantics<parallel>, #tpu.dimension_semantics<parallel>], iteration_bounds = array<i64: 2, 1>, scalar_prefetch = 0 : i64, scratch_operands = 0 : i64, tpu.core_type = #tpu.core_type<tc>, window_params = [{transform_indices = @transform_0, window_bounds = array<i64: 1, 256, 128>}, {pipeline_mode = #tpu.pipeline_mode<synchronous>, transform_indices = @transform_1, window_bounds = array<i64: 128, 128>}, {pipeline_mode = #tpu.pipeline_mode<synchronous>, transform_indices = @transform_2, window_bounds = array<i64: 1, 128>}, {pipeline_mode = #tpu.pipeline_mode<synchronous>, transform_indices = @transform_3, window_bounds = array<i64: 128, 128>}, {pipeline_mode = #tpu.pipeline_mode<synchronous>, transform_indices = @transform_4, window_bounds = array<i64: 1, 128>}, {transform_indices = @transform_5, window_bounds = array<i64: 1, 256, 128>}, {transform_indices = @transform_6, window_bounds = array<i64: 1, 256, 128>}]} {
    %c0 = arith.constant 0 : index
    %c0_0 = arith.constant 0 : index
    %c0_1 = arith.constant 0 : index
    %0 = vector.load %arg2[%c0, %c0_0, %c0_1] : memref<1x256x128xbf16, #tpu.memory_space<vmem>>, vector<1x256x128xbf16>
    %1 = vector.shape_cast %0 : vector<1x256x128xbf16> to vector<256x128xbf16>
    %c0_2 = arith.constant 0 : index
    %c0_3 = arith.constant 0 : index
    %2 = vector.load %arg3[%c0_2, %c0_3] : memref<128x128xbf16, #tpu.memory_space<vmem>>, vector<128x128xbf16>
    %cst = arith.constant dense<0.000000e+00> : vector<256x128xf32>
    %3 = tpu.matmul %1, %2, %cst {dimension_numbers = #tpu.dot_dimension_numbers<[1], [0], [0], [1], [0, 0, 1, 1], [], []>} : vector<256x128xbf16>, vector<128x128xbf16>, vector<256x128xf32> -> vector<256x128xf32>
    %c0_4 = arith.constant 0 : index
    %c0_5 = arith.constant 0 : index
    %4 = vector.load %arg4[%c0_4, %c0_5] : memref<1x128xf32, #tpu.memory_space<vmem>>, vector<1x128xf32>
    %5 = vector.broadcast %4 : vector<1x128xf32> to vector<256x128xf32>
    %6 = arith.addf %3, %5 : vector<256x128xf32>
    %7 = arith.truncf %6 : vector<256x128xf32> to vector<256x128xbf16>
    %c0_6 = arith.constant 0 : index
    %c0_7 = arith.constant 0 : index
    %c0_8 = arith.constant 0 : index
    %8 = vector.load %arg7[%c0_6, %c0_7, %c0_8] : memref<1x256x128xbf16, #tpu.memory_space<vmem>>, vector<1x256x128xbf16>
    %9 = vector.shape_cast %8 : vector<1x256x128xbf16> to vector<256x128xbf16>
    %10 = vector.shape_cast %7 : vector<256x128xbf16> to vector<1x256x128xbf16>
    tpu.vector_store %arg7[%c0_6, %c0_7, %c0_8], %10 {strides = array<i32>} : memref<1x256x128xbf16, #tpu.memory_space<vmem>>, vector<1x256x128xbf16>,
    %c0_9 = arith.constant 0 : index
    %c0_10 = arith.constant 0 : index
    %11 = vector.load %arg5[%c0_9, %c0_10] : memref<128x128xbf16, #tpu.memory_space<vmem>>, vector<128x128xbf16>
    %cst_11 = arith.constant dense<0.000000e+00> : vector<256x128xf32>
    %12 = tpu.matmul %1, %11, %cst_11 {dimension_numbers = #tpu.dot_dimension_numbers<[1], [0], [0], [1], [0, 0, 1, 1], [], []>} : vector<256x128xbf16>, vector<128x128xbf16>, vector<256x128xf32> -> vector<256x128xf32>
    %c0_12 = arith.constant 0 : index
    %c0_13 = arith.constant 0 : index
    %13 = vector.load %arg6[%c0_12, %c0_13] : memref<1x128xf32, #tpu.memory_space<vmem>>, vector<1x128xf32>
    %14 = vector.broadcast %13 : vector<1x128xf32> to vector<256x128xf32>
    %15 = arith.addf %12, %14 : vector<256x128xf32>
    %16 = arith.truncf %15 : vector<256x128xf32> to vector<256x128xbf16>
    %c0_14 = arith.constant 0 : index
    %c0_15 = arith.constant 0 : index
    %c0_16 = arith.constant 0 : index
    %17 = vector.load %arg8[%c0_14, %c0_15, %c0_16] : memref<1x256x128xbf16, #tpu.memory_space<vmem>>, vector<1x256x128xbf16>
    %18 = vector.shape_cast %17 : vector<1x256x128xbf16> to vector<256x128xbf16>
    %19 = vector.shape_cast %16 : vector<256x128xbf16> to vector<1x256x128xbf16>
    tpu.vector_store %arg8[%c0_14, %c0_15, %c0_16], %19 {strides = array<i32>} : memref<1x256x128xbf16, #tpu.memory_space<vmem>>, vector<1x256x128xbf16>,
    return
  }
  func.func @transform_0(%arg0: i32, %arg1: i32) -> (i32, i32, i32) {
    %c0_i32 = arith.constant 0 : i32
    %c0_i32_0 = arith.constant 0 : i32
    return %arg0, %arg1, %c0_i32 : i32, i32, i32
  }
  func.func @transform_1(%arg0: i32, %arg1: i32) -> (i32, i32) {
    %c0_i32 = arith.constant 0 : i32
    %c0_i32_0 = arith.constant 0 : i32
    %c0_i32_1 = arith.constant 0 : i32
    return %c0_i32, %c0_i32_0 : i32, i32
  }
  func.func @transform_2(%arg0: i32, %arg1: i32) -> (i32, i32) {
    %c0_i32 = arith.constant 0 : i32
    %c0_i32_0 = arith.constant 0 : i32
    %c0_i32_1 = arith.constant 0 : i32
    return %c0_i32, %c0_i32_0 : i32, i32
  }
  func.func @transform_3(%arg0: i32, %arg1: i32) -> (i32, i32) {
    %c0_i32 = arith.constant 0 : i32
    %c0_i32_0 = arith.constant 0 : i32
    %c0_i32_1 = arith.constant 0 : i32
    return %c0_i32, %c0_i32_0 : i32, i32
  }
  func.func @transform_4(%arg0: i32, %arg1: i32) -> (i32, i32) {
    %c0_i32 = arith.constant 0 : i32
    %c0_i32_0 = arith.constant 0 : i32
    %c0_i32_1 = arith.constant 0 : i32
    return %c0_i32, %c0_i32_0 : i32, i32
  }
  func.func @transform_5(%arg0: i32, %arg1: i32) -> (i32, i32, i32) {
    %c0_i32 = arith.constant 0 : i32
    %c0_i32_0 = arith.constant 0 : i32
    return %arg0, %arg1, %c0_i32 : i32, i32, i32
  }
  func.func @transform_6(%arg0: i32, %arg1: i32) -> (i32, i32, i32) {
    %c0_i32 = arith.constant 0 : i32
    %c0_i32_0 = arith.constant 0 : i32
    return %arg0, %arg1, %c0_i32 : i32, i32, i32
  }
}

</mosaic_0001>

<llo_original>
// kernel: tpu_custom_call.1
$region0: #{tpu_custom_call.1}
  #allocation0 [shape = 'u32[]', space=smem, size = 0x4, offset = 0x4, fixed_abs, tag = 'smem constant byte address 0x4 - core index']
  #allocation1 [shape = 'u32[144,128]{1,0:T(1,128)}', space=vmem, size = 0x12000, scoped, tag = 'internal scratch']
  %s0 = inlined_call_operand.hbm [shape: bf16[2,256,128], index: 0, kind: input, shape index: {}]
  %s1 = inlined_call_operand.hbm [shape: bf16[128,128], index: 1, kind: input, shape index: {}]
  %s2 = inlined_call_operand.vmem [shape: f32[1,128], index: 2, kind: input, shape index: {}]
  %s3 = inlined_call_operand.hbm [shape: bf16[128,128], index: 3, kind: input, shape index: {}]
  %s4 = inlined_call_operand.vmem [shape: f32[1,128], index: 4, kind: input, shape index: {}]
  %s5 = inlined_call_operand.hbm [shape: bf16[2,256,128], index: 5, kind: output, shape index: {0}]
  %s6 = inlined_call_operand.hbm [shape: bf16[2,256,128], index: 6, kind: output, shape index: {1}]
  %7 = xla_tuple %s5, %s6
  %s8 = sld [smem:[#allocation0]]
  $region73: #{tpu_custom_call.1} parent=0
    _
  %s10 = ssub.s32 1, %s8
  %s11 = scalar_select 0, %s10, %s8
  $region1: #{tpu_custom_call.1} parent=0
    #allocation2 [shape = 'u8[131072]{0}', space=vmem, size = 0x20000, scoped, tag = 'input window, operand 0']
    #allocation3 [shape = 's32[2]{0}', space=sflag, size = 0x8, scoped, tag = 'scoped memory for tpu_custom_call.1']
    #allocation4 [shape = 's32[2]{0}', space=sflag, size = 0x8, scoped, tag = 'scoped memory for tpu_custom_call.1']
    #allocation5 [shape = 'u8[32768]{0}', space=vmem, size = 0x8000, scoped, tag = 'input window, operand 1, single buffered']
    #allocation6 [shape = 's32[1]{0}', space=sflag, size = 0x4, scoped, tag = 'scoped memory for tpu_custom_call.1']
    #allocation7 [shape = 'u8[32768]{0}', space=vmem, size = 0x8000, scoped, tag = 'input window, operand 3, single buffered']
    #allocation8 [shape = 'u8[131072]{0}', space=vmem, size = 0x20000, scoped, tag = 'output window, operand 0']
    #allocation9 [shape = 'u8[131072]{0}', space=vmem, size = 0x20000, scoped, tag = 'output window, operand 1']
    #allocation10 [shape = 's32[2]{0}', space=sflag, size = 0x8, scoped, tag = 'scoped memory for tpu_custom_call.1']
    %12 = vsyncpa [#allocation3], 0
    %s13 = scalar_lea.sflag [#allocation3], 1
    %14 = vsyncpa %s13, 0
    %15 = vsyncpa [#allocation6], 0
    %16 = vsyncpa [#allocation4], 0
    %s17 = scalar_lea.sflag [#allocation4], 1
    %18 = vsyncpa %s17, 0
    %19 = vsyncpa [#allocation10], 0
    %s20 = scalar_lea.sflag [#allocation10], 1
    %21 = vsyncpa %s20, 0
    loop: start=0, step=1, limit=4
    $region2: #{tpu_custom_call.1} parent=1 // loop_pre_header
      _
    $region3: #{tpu_custom_call.1} parent=1 // loop_header
      %s23 = sphi 0, %s27
      %p24 = scmp.ge.s32.totalorder %s23, 4
      %s30 = sphi 0, %s42
      %s31 = sphi 0, %s38
      %s32 = sphi 0, %s30
      %s33 = sphi 0, %s31
      %s34 = sphi 0, %s32
      %s35 = sphi 0, %s33
      %s47 = sphi 0, %s49
      %s50 = sphi 0, %s47
      %s51 = sphi 0, %s50
      %s67 = sphi 0, %s51
      %s71 = sphi 0, %s71
      %s73 = sphi 0, %s71
      %s74 = sphi 0, %s73
      %s88 = sphi 0, %s74
      %s92 = sphi 0, %s92
      %s94 = sphi 0, %s92
      %s95 = sphi 0, %s94
      %s109 = sphi 0, %s95
      %s113 = sphi 0, %s113
      %s115 = sphi 0, %s113
      %s116 = sphi 0, %s115
      %s130 = sphi 0, %s116
      %s134 = sphi 0, %s134
      %s136 = sphi 0, %s134
      %s137 = sphi 0, %s136
      %s151 = sphi 0, %s137
      %s159 = sphi 0, %s161
      %s162 = sphi 0, %s159
      %s163 = sphi 0, %s162
      %s179 = sphi 0, %s163
      %s187 = sphi 0, %s189
      %s190 = sphi 0, %s187
      %s191 = sphi 0, %s190
      %s207 = sphi 0, %s191
    $region4: #{tpu_custom_call.1} parent=1 // loop_header_branch
      %26 = sbr.rel (%p24) target = $region8
    $region5: #{tpu_custom_call.1} parent=1 // loop_body
      %s28 = ssub.s32 %s23, 1
      %s29 = ssub.s32 %s23, 2
      %s36 = sadd.s32 1, %s31
      %p37 = scmp.ge.s32.totalorder %s36, 1
      %s38 = scalar_select %p37, 0, %s36
      %s39 = sadd.s32 1, %s30
      %s40 = scalar_select %p37, %s39, %s30
      %p41 = scmp.ge.s32.totalorder %s40, 2
      %s42 = scalar_select %p41, 0, %s40
      %s43 = ssub.s32 %s30, %s42
      %s44 = ssub.s32 %s31, %s38
      %s45 = sor.u32 %s43, %s44
      %p46 = scmp.eq.s32.totalorder %s45, 0
      %s48 = sadd.s32 %s47, 1
      %s49 = scalar_select %p46, %s47, %s48
      %p52 = pneg %p46
      %p53 = scmp.eq.s32.totalorder %s23, 1
      %p54 = por %p52, %p53
      %p55 = scmp.ne.s32.totalorder %s47, %s50
      %p56 = scmp.eq.s32.totalorder %s23, 0
      %p57 = por %p55, %p56
      %p58 = scmp.ne.s32.totalorder %s47, %s50
      %p59 = scmp.eq.s32.totalorder %s28, 1
      %p60 = por %p58, %p59
      %p61 = scmp.ne.s32.totalorder %s50, %s51
      %p62 = scmp.eq.s32.totalorder %s28, 0
      %p63 = por %p61, %p62
      %p64 = scmp.ne.s32.totalorder %s50, %s51
      %p65 = scmp.eq.s32.totalorder %s29, 1
      %p66 = por %p64, %p65
      %p68 = scmp.ne.s32.totalorder %s51, %s67
      %p69 = scmp.eq.s32.totalorder %s29, 0
      %p70 = por %p68, %p69
      %s72 = sadd.s32 %s71, 1
      %p75 = scmp.eq.s32.totalorder %s23, 1
      %p76 = scmp.ne.s32.totalorder %s71, %s73
      %p77 = scmp.eq.s32.totalorder %s23, 0
      %p78 = por %p76, %p77
      %p79 = scmp.ne.s32.totalorder %s71, %s73
      %p80 = scmp.eq.s32.totalorder %s28, 1
      %p81 = por %p79, %p80
      %p82 = scmp.ne.s32.totalorder %s73, %s74
      %p83 = scmp.eq.s32.totalorder %s28, 0
      %p84 = por %p82, %p83
      %p85 = scmp.ne.s32.totalorder %s73, %s74
      %p86 = scmp.eq.s32.totalorder %s29, 1
      %p87 = por %p85, %p86
      %p89 = scmp.ne.s32.totalorder %s74, %s88
      %p90 = scmp.eq.s32.totalorder %s29, 0
      %p91 = por %p89, %p90
      %s93 = sadd.s32 %s92, 1
      %p96 = scmp.eq.s32.totalorder %s23, 1
      %p97 = scmp.ne.s32.totalorder %s92, %s94
      %p98 = scmp.eq.s32.totalorder %s23, 0
      %p99 = por %p97, %p98
      %p100 = scmp.ne.s32.totalorder %s92, %s94
      %p101 = scmp.eq.s32.totalorder %s28, 1
      %p102 = por %p100, %p101
      %p103 = scmp.ne.s32.totalorder %s94, %s95
      %p104 = scmp.eq.s32.totalorder %s28, 0
      %p105 = por %p103, %p104
      %p106 = scmp.ne.s32.totalorder %s94, %s95
      %p107 = scmp.eq.s32.totalorder %s29, 1
      %p108 = por %p106, %p107
      %p110 = scmp.ne.s32.totalorder %s95, %s109
      %p111 = scmp.eq.s32.totalorder %s29, 0
      %p112 = por %p110, %p111
      %s114 = sadd.s32 %s113, 1
      %p117 = scmp.eq.s32.totalorder %s23, 1
      %p118 = scmp.ne.s32.totalorder %s113, %s115
      %p119 = scmp.eq.s32.totalorder %s23, 0
      %p120 = por %p118, %p119
      %p121 = scmp.ne.s32.totalorder %s113, %s115
      %p122 = scmp.eq.s32.totalorder %s28, 1
      %p123 = por %p121, %p122
      %p124 = scmp.ne.s32.totalorder %s115, %s116
      %p125 = scmp.eq.s32.totalorder %s28, 0
      %p126 = por %p124, %p125
      %p127 = scmp.ne.s32.totalorder %s115, %s116
      %p128 = scmp.eq.s32.totalorder %s29, 1
      %p129 = por %p127, %p128
      %p131 = scmp.ne.s32.totalorder %s116, %s130
      %p132 = scmp.eq.s32.totalorder %s29, 0
      %p133 = por %p131, %p132
      %s135 = sadd.s32 %s134, 1
      %p138 = scmp.eq.s32.totalorder %s23, 1
      %p139 = scmp.ne.s32.totalorder %s134, %s136
      %p140 = scmp.eq.s32.totalorder %s23, 0
      %p141 = por %p139, %p140
      %p142 = scmp.ne.s32.totalorder %s134, %s136
      %p143 = scmp.eq.s32.totalorder %s28, 1
      %p144 = por %p142, %p143
      %p145 = scmp.ne.s32.totalorder %s136, %s137
      %p146 = scmp.eq.s32.totalorder %s28, 0
      %p147 = por %p145, %p146
      %p148 = scmp.ne.s32.totalorder %s136, %s137
      %p149 = scmp.eq.s32.totalorder %s29, 1
      %p150 = por %p148, %p149
      %p152 = scmp.ne.s32.totalorder %s137, %s151
      %p153 = scmp.eq.s32.totalorder %s29, 0
      %p154 = por %p152, %p153
      %s155 = ssub.s32 %s30, %s42
      %s156 = ssub.s32 %s31, %s38
      %s157 = sor.u32 %s155, %s156
      %p158 = scmp.eq.s32.totalorder %s157, 0
      %s160 = sadd.s32 %s159, 1
      %s161 = scalar_select %p158, %s159, %s160
      %p164 = pneg %p158
      %p165 = scmp.eq.s32.totalorder %s23, 1
      %p166 = por %p164, %p165
      %p167 = scmp.ne.s32.totalorder %s159, %s162
      %p168 = scmp.eq.s32.totalorder %s23, 0
      %p169 = por %p167, %p168
      %p170 = scmp.ne.s32.totalorder %s159, %s162
      %p171 = scmp.eq.s32.totalorder %s28, 1
      %p172 = por %p170, %p171
      %p173 = scmp.ne.s32.totalorder %s162, %s163
      %p174 = scmp.eq.s32.totalorder %s28, 0
      %p175 = por %p173, %p174
      %p176 = scmp.ne.s32.totalorder %s162, %s163
      %p177 = scmp.eq.s32.totalorder %s29, 1
      %p178 = por %p176, %p177
      %p180 = scmp.ne.s32.totalorder %s163, %s179
      %p181 = scmp.eq.s32.totalorder %s29, 0
      %p182 = por %p180, %p181
      %s183 = ssub.s32 %s30, %s42
      %s184 = ssub.s32 %s31, %s38
      %s185 = sor.u32 %s183, %s184
      %p186 = scmp.eq.s32.totalorder %s185, 0
      %s188 = sadd.s32 %s187, 1
      %s189 = scalar_select %p186, %s187, %s188
      %p192 = pneg %p186
      %p193 = scmp.eq.s32.totalorder %s23, 1
      %p194 = por %p192, %p193
      %p195 = scmp.ne.s32.totalorder %s187, %s190
      %p196 = scmp.eq.s32.totalorder %s23, 0
      %p197 = por %p195, %p196
      %p198 = scmp.ne.s32.totalorder %s187, %s190
      %p199 = scmp.eq.s32.totalorder %s28, 1
      %p200 = por %p198, %p199
      %p201 = scmp.ne.s32.totalorder %s190, %s191
      %p202 = scmp.eq.s32.totalorder %s28, 0
      %p203 = por %p201, %p202
      %p204 = scmp.ne.s32.totalorder %s190, %s191
      %p205 = scmp.eq.s32.totalorder %s29, 1
      %p206 = por %p204, %p205
      %p208 = scmp.ne.s32.totalorder %s191, %s207
      %p209 = scmp.eq.s32.totalorder %s29, 0
      %p210 = por %p208, %p209
      %p211 = scmp.le.s32.totalorder 1, %s23
      %p212 = scmp.lt.s32.totalorder %s23, 3
      %p213 = pnand %p211, %p212
      %p214 = pneg %p213
      // Predicated region
      $region9: #{tpu_custom_call.1} parent=5 // pred_check
        _
      $region10: #{tpu_custom_call.1} parent=5 // pred_check_branch
        %216 = sbr.rel (%p213) target = $region12
      $region11: #{tpu_custom_call.1} parent=5 // pred_region
        %s217 = ssub.s32 %s23, 1
        // Predicated region
        $region13: #{tpu_custom_call.1} parent=11 // pred_check
          %p218 = pneg %p84
        $region14: #{tpu_custom_call.1} parent=11 // pred_check_branch
          %220 = sbr.rel (%p218) target = $region16
        $region15: #{tpu_custom_call.1} parent=11 // pred_region
          %s222 = ssub.s32 1024, 1024
          %223 = vsyncadd [#allocation6], %s222
          %s224 = sshll.u32 [#allocation5], 4
          %s225 = int_to_ptr.vmem [resolvable:$true] %s224
          %230 = dma.hbm_to_vmem [thread:$0]  %s1, 1024, %s225, [#allocation6], 64, 64, 4
        $region16: #{tpu_custom_call.1} parent=11 // pred_fallthru
          _
        // Predicated region
        $region17: #{tpu_custom_call.1} parent=11 // pred_check
          %p231 = pneg %p105
        $region18: #{tpu_custom_call.1} parent=11 // pred_check_branch
          %233 = sbr.rel (%p231) target = $region20
        $region19: #{tpu_custom_call.1} parent=11 // pred_region
          _
        $region20: #{tpu_custom_call.1} parent=11 // pred_fallthru
          _
        // Predicated region
        $region21: #{tpu_custom_call.1} parent=11 // pred_check
          %p234 = pneg %p126
        $region22: #{tpu_custom_call.1} parent=11 // pred_check_branch
          %236 = sbr.rel (%p234) target = $region24
        $region23: #{tpu_custom_call.1} parent=11 // pred_region
          %s238 = ssub.s32 1024, 1024
          %239 = vsyncadd [#allocation6], %s238
          %s240 = sshll.u32 [#allocation7], 4
          %s241 = int_to_ptr.vmem [resolvable:$true] %s240
          %246 = dma.hbm_to_vmem [thread:$0]  %s3, 1024, %s241, [#allocation6], 64, 64, 4
        $region24: #{tpu_custom_call.1} parent=11 // pred_fallthru
          _
        // Predicated region
        $region25: #{tpu_custom_call.1} parent=11 // pred_check
          %p247 = pneg %p147
        $region26: #{tpu_custom_call.1} parent=11 // pred_check_branch
          %249 = sbr.rel (%p247) target = $region28
        $region27: #{tpu_custom_call.1} parent=11 // pred_region
          _
        $region28: #{tpu_custom_call.1} parent=11 // pred_fallthru
          _
      $region12: #{tpu_custom_call.1} parent=5 // pred_fallthru
        _
      %p250 = scmp.lt.s32.totalorder %s23, 2
      // Predicated region
      $region29: #{tpu_custom_call.1} parent=5 // pred_check
        %p251 = pneg %p250
      $region30: #{tpu_custom_call.1} parent=5 // pred_check_branch
        %253 = sbr.rel (%p251) target = $region32
      $region31: #{tpu_custom_call.1} parent=5 // pred_region
        // Predicated region
        $region33: #{tpu_custom_call.1} parent=31 // pred_check
          %p254 = pneg %p57
        $region34: #{tpu_custom_call.1} parent=31 // pred_check_branch
          %256 = sbr.rel (%p254) target = $region36
        $region35: #{tpu_custom_call.1} parent=31 // pred_region
          %s257 = sand.u32 %s47, 1
          %s258 = scalar_lea.sflag [#allocation3], %s257
          %s259 = sand.u32 %s47, 1
          %s260 = smul.addr %s259, 128
          %s261 = scalar_lea.vmem [#allocation2], %s260
          %s262 = smul.u32 32, %s31
          %s264 = ssub.s32 2048, 2048
          %265 = vsyncadd %s258, %s264
          %s266 = smul.addr %s30, 32
          %s267 = sadd.s32 %s262, %s266
          %s268 = smul.addr %s267, 64
          %s269 = scalar_lea.hbm %s0, %s268
          %s270 = sshll.u32 %s261, 4
          %s271 = int_to_ptr.vmem [resolvable:$true] %s270
          %276 = dma.hbm_to_vmem [thread:$0]  %s269, 2048, %s271, %s258, 64, 64, 4
        $region36: #{tpu_custom_call.1} parent=31 // pred_fallthru
          _
      $region32: #{tpu_custom_call.1} parent=5 // pred_fallthru
        _
      %p277 = scmp.le.s32.totalorder 1, %s23
      %p278 = scmp.lt.s32.totalorder %s23, 3
      %p279 = pnand %p277, %p278
      %p280 = pneg %p279
      // Predicated region
      $region37: #{tpu_custom_call.1} parent=5 // pred_check
        _
      $region38: #{tpu_custom_call.1} parent=5 // pred_check_branch
        %282 = sbr.rel (%p279) target = $region40
      $region39: #{tpu_custom_call.1} parent=5 // pred_region
        %s283 = ssub.s32 %s23, 1
        %s284 = sand.u32 %s50, 1
        %s285 = scalar_lea.sflag [#allocation3], %s284
        %s286 = sand.u32 %s50, 1
        %s287 = smul.addr %s286, 128
        %s288 = scalar_lea.vmem [#allocation2], %s287
        // Predicated region
        $region41: #{tpu_custom_call.1} parent=39 // pred_check
          %p289 = pneg %p63
        $region42: #{tpu_custom_call.1} parent=39 // pred_check_branch
          %291 = sbr.rel (%p289) target = $region44
        $region43: #{tpu_custom_call.1} parent=39 // pred_region
          %292 = dma.done %s285, 2048
        $region44: #{tpu_custom_call.1} parent=39 // pred_fallthru
          _
        // Predicated region
        $region45: #{tpu_custom_call.1} parent=39 // pred_check
          %p293 = pneg %p84
        $region46: #{tpu_custom_call.1} parent=39 // pred_check_branch
          %295 = sbr.rel (%p293) target = $region48
        $region47: #{tpu_custom_call.1} parent=39 // pred_region
          %296 = dma.done [#allocation6], 1024
        $region48: #{tpu_custom_call.1} parent=39 // pred_fallthru
          _
        // Predicated region
        $region49: #{tpu_custom_call.1} parent=39 // pred_check
          %p297 = pneg %p126
        $region50: #{tpu_custom_call.1} parent=39 // pred_check_branch
          %299 = sbr.rel (%p297) target = $region52
        $region51: #{tpu_custom_call.1} parent=39 // pred_region
          %300 = dma.done [#allocation6], 1024
        $region52: #{tpu_custom_call.1} parent=39 // pred_fallthru
          _
        %s301 = sand.u32 %s50, 1
        %s302 = scalar_lea.sflag [#allocation3], %s301
        %s303 = sand.u32 %s50, 1
        %s304 = smul.addr %s303, 128
        %s305 = scalar_lea.vmem [#allocation2], %s304
        %p306 = pneg %p63
        %p307 = pneg %p60
        %p308 = pneg %p84
        %p309 = pneg %p81
        %p310 = pneg %p105
        %p311 = pneg %p102
        %p312 = pneg %p126
        %p313 = pneg %p123
        %p314 = pneg %p147
        %p315 = pneg %p144
        %p316 = pneg %p175
        %p317 = pneg %p172
        %s318 = sand.u32 %s162, 1
        %s319 = scalar_lea.sflag [#allocation4], %s318
        %s320 = sand.u32 %s162, 1
        %s321 = smul.addr %s320, 128
        %s322 = scalar_lea.vmem [#allocation8], %s321
        %p323 = pneg %p203
        %p324 = pneg %p200
        %s325 = sand.u32 %s190, 1
        %s326 = scalar_lea.sflag [#allocation10], %s325
        %s327 = sand.u32 %s190, 1
        %s328 = smul.addr %s327, 128
        %s329 = scalar_lea.vmem [#allocation9], %s328
        %s330 = smul.u32 32, %s33
        %s331 = smul.u32 32, %s33
        %s332 = smul.u32 32, %s33
        %v334 = vld [vmem:[%s288] sm:$0xf]
        %v335 = vld [vmem:[%s288 + $0x4] sm:$0xf]
        %v336 = vld [vmem:[%s288 + $0x8] sm:$0xf]
        %v337 = vld [vmem:[%s288 + $0xc] sm:$0xf]
        %v338 = vld [vmem:[%s288 + $0x10] sm:$0xf]
        %v339 = vld [vmem:[%s288 + $0x14] sm:$0xf]
        %v340 = vld [vmem:[%s288 + $0x18] sm:$0xf]
        %v341 = vld [vmem:[%s288 + $0x1c] sm:$0xf]
        %v342 = vld [vmem:[%s288 + $0x20] sm:$0xf]
        %v343 = vld [vmem:[%s288 + $0x24] sm:$0xf]
        %v344 = vld [vmem:[%s288 + $0x28] sm:$0xf]
        %v345 = vld [vmem:[%s288 + $0x2c] sm:$0xf]
        %v346 = vld [vmem:[%s288 + $0x30] sm:$0xf]
        %v347 = vld [vmem:[%s288 + $0x34] sm:$0xf]
        %v348 = vld [vmem:[%s288 + $0x38] sm:$0xf]
        %v349 = vld [vmem:[%s288 + $0x3c] sm:$0xf]
        %v350 = vld [vmem:[%s288 + $0x40] sm:$0xf]
        %v351 = vld [vmem:[%s288 + $0x44] sm:$0xf]
        %v352 = vld [vmem:[%s288 + $0x48] sm:$0xf]
        %v353 = vld [vmem:[%s288 + $0x4c] sm:$0xf]
        %v354 = vld [vmem:[%s288 + $0x50] sm:$0xf]
        %v355 = vld [vmem:[%s288 + $0x54] sm:$0xf]
        %v356 = vld [vmem:[%s288 + $0x58] sm:$0xf]
        %v357 = vld [vmem:[%s288 + $0x5c] sm:$0xf]
        %v358 = vld [vmem:[%s288 + $0x60] sm:$0xf]
        %v359 = vld [vmem:[%s288 + $0x64] sm:$0xf]
        %v360 = vld [vmem:[%s288 + $0x68] sm:$0xf]
        %v361 = vld [vmem:[%s288 + $0x6c] sm:$0xf]
        %v362 = vld [vmem:[%s288 + $0x70] sm:$0xf]
        %v363 = vld [vmem:[%s288 + $0x74] sm:$0xf]
        %v364 = vld [vmem:[%s288 + $0x78] sm:$0xf]
        %v365 = vld [vmem:[%s288 + $0x7c] sm:$0xf]
        %v366 = vld [vmem:[#allocation5] sm:$0xf]
        %v367 = vld [vmem:[#allocation5 + $0x4] sm:$0xf]
        %v368 = vld [vmem:[#allocation5 + $0x8] sm:$0xf]
        %v369 = vld [vmem:[#allocation5 + $0xc] sm:$0xf]
        %v370 = vld [vmem:[#allocation5 + $0x10] sm:$0xf]
        %v371 = vld [vmem:[#allocation5 + $0x14] sm:$0xf]
        %v372 = vld [vmem:[#allocation5 + $0x18] sm:$0xf]
        %v373 = vld [vmem:[#allocation5 + $0x1c] sm:$0xf]
        %v374 = vld [vmem:[#allocation5 + $0x20] sm:$0xf]
        %v375 = vld [vmem:[#allocation5 + $0x24] sm:$0xf]
        %v376 = vld [vmem:[#allocation5 + $0x28] sm:$0xf]
        %v377 = vld [vmem:[#allocation5 + $0x2c] sm:$0xf]
        %v378 = vld [vmem:[#allocation5 + $0x30] sm:$0xf]
        %v379 = vld [vmem:[#allocation5 + $0x34] sm:$0xf]
        %v380 = vld [vmem:[#allocation5 + $0x38] sm:$0xf]
        %v381 = vld [vmem:[#allocation5 + $0x3c] sm:$0xf]
        %v382 = vld [vmem:[%s2] sm:$0x1]
        %v384 = vlaneseq
        %v385 = vshrl.u32 %v384, 7
        %v386 = vsub.s32 0, %v385
        %v387 = vrot.slane %v382, %v386
        %v421 = vunpack.c.l.b16 %v334
        %v422 = vunpack.c.l.b16 %v335
        %v423 = vunpack.c.l.b16 %v336
        %v424 = vunpack.c.l.b16 %v337
        %v425 = vunpack.c.l.b16 %v338
        %v426 = vunpack.c.l.b16 %v339
        %v427 = vunpack.c.l.b16 %v340
        %v428 = vunpack.c.l.b16 %v341
        %v429 = vunpack.c.l.b16 %v342
        %v430 = vunpack.c.l.b16 %v343
        %v431 = vunpack.c.l.b16 %v344
        %v432 = vunpack.c.l.b16 %v345
        %v433 = vunpack.c.l.b16 %v346
        %v434 = vunpack.c.l.b16 %v347
        %v435 = vunpack.c.l.b16 %v348
        %v436 = vunpack.c.l.b16 %v349
        %v437 = vunpack.c.l.b16 %v350
        %v438 = vunpack.c.l.b16 %v351
        %v439 = vunpack.c.l.b16 %v352
        %v440 = vunpack.c.l.b16 %v353
        %v441 = vunpack.c.l.b16 %v354
        %v442 = vunpack.c.l.b16 %v355
        %v443 = vunpack.c.l.b16 %v356
        %v444 = vunpack.c.l.b16 %v357
        %v445 = vunpack.c.l.b16 %v358
        %v446 = vunpack.c.l.b16 %v359
        %v447 = vunpack.c.l.b16 %v360
        %v448 = vunpack.c.l.b16 %v361
        %v449 = vunpack.c.l.b16 %v362
        %v450 = vunpack.c.l.b16 %v363
        %v451 = vunpack.c.l.b16 %v364
        %v452 = vunpack.c.l.b16 %v365
        %v453 = vpack.c.b16 %v422, %v421
        %v454 = vpack.c.b16 %v424, %v423
        %v455 = vpack.c.b16 %v426, %v425
        %v456 = vpack.c.b16 %v428, %v427
        %v457 = vpack.c.b16 %v430, %v429
        %v458 = vpack.c.b16 %v432, %v431
        %v459 = vpack.c.b16 %v434, %v433
        %v460 = vpack.c.b16 %v436, %v435
        %v461 = vpack.c.b16 %v438, %v437
        %v462 = vpack.c.b16 %v440, %v439
        %v463 = vpack.c.b16 %v442, %v441
        %v464 = vpack.c.b16 %v444, %v443
        %v465 = vpack.c.b16 %v446, %v445
        %v466 = vpack.c.b16 %v448, %v447
        %v467 = vpack.c.b16 %v450, %v449
        %v468 = vpack.c.b16 %v452, %v451
        %v501 = vunpack.c.l.b16 %v366
        %v502 = vunpack.c.l.b16 %v367
        %v503 = vunpack.c.l.b16 %v368
        %v504 = vunpack.c.l.b16 %v369
        %v505 = vunpack.c.l.b16 %v370
        %v506 = vunpack.c.l.b16 %v371
        %v507 = vunpack.c.l.b16 %v372
        %v508 = vunpack.c.l.b16 %v373
        %v509 = vunpack.c.l.b16 %v374
        %v510 = vunpack.c.l.b16 %v375
        %v511 = vunpack.c.l.b16 %v376
        %v512 = vunpack.c.l.b16 %v377
        %v513 = vunpack.c.l.b16 %v378
        %v514 = vunpack.c.l.b16 %v379
        %v515 = vunpack.c.l.b16 %v380
        %v516 = vunpack.c.l.b16 %v381
        %v517 = vpack.c.b16 %v502, %v501
        %v518 = vpack.c.b16 %v504, %v503
        %v519 = vpack.c.b16 %v506, %v505
        %v520 = vpack.c.b16 %v508, %v507
        %v521 = vpack.c.b16 %v510, %v509
        %v522 = vpack.c.b16 %v512, %v511
        %v523 = vpack.c.b16 %v514, %v513
        %v524 = vpack.c.b16 %v516, %v515
        %533 = vmatprep.subr.bf16.mxu0 0
        %534 = vmatpush1.bf16.msra.mxu0 %v524
        %535 = vmatprep.subr.bf16.mxu0 0
        %536 = vmatpush1.bf16.msra.mxu0 %v523
        %537 = vmatprep.subr.bf16.mxu0 0
        %538 = vmatpush1.bf16.msra.mxu0 %v522
        %539 = vmatprep.subr.bf16.mxu0 0
        %540 = vmatpush1.bf16.msra.mxu0 %v521
        %541 = vmatprep.subr.bf16.mxu0 0
        %542 = vmatpush1.bf16.msra.mxu0 %v520
        %543 = vmatprep.subr.bf16.mxu0 0
        %544 = vmatpush1.bf16.msra.mxu0 %v519
        %545 = vmatprep.subr.bf16.mxu0 0
        %546 = vmatpush1.bf16.msra.mxu0 %v518
        %547 = vmatprep.subr.bf16.mxu0 0
        %548 = vmatpush1.bf16.msra.mxu0 %v517
        %549 = vmatprep.subr.bf16.mxu0 0
        %550 = vmatpush2.bf16.msra.mxu0 0
        %551 = vmatprep.subr.bf16.mxu0 0
        %552 = vmatpush2.bf16.msra.mxu0 0
        %553 = vmatprep.subr.bf16.mxu0 0
        %554 = vmatpush2.bf16.msra.mxu0 0
        %555 = vmatprep.subr.bf16.mxu0 0
        %556 = vmatpush2.bf16.msra.mxu0 0
        %557 = vmatprep.subr.bf16.mxu0 0
        %558 = vmatpush2.bf16.msra.mxu0 0
        %559 = vmatprep.subr.bf16.mxu0 0
        %560 = vmatpush2.bf16.msra.mxu0 0
        %561 = vmatprep.subr.bf16.mxu0 0
        %562 = vmatpush2.bf16.msra.mxu0 0
        %563 = vmatprep.subr.bf16.mxu0 0
        %564 = vmatpush2.bf16.msra.mxu0 0
        %565 = vmatprep.mubr.bf16.mxu0 0
        %566 = vmatmul.mubr.bf16.gmra.mxu0 %v453
        %v567 = vpop.f32.mrf.mxu0
        %v568 = vadd.f32 %v387, %v567
        %v569 = vpop.f32.mrf.mxu0
        %v570 = vpop.f32.mrf.mxu0
        %v571 = vadd.f32 %v387, %v570
        %v572 = vpop.f32.mrf.mxu0
        %573 = vmatprep.mubr.bf16.mxu0 0
        %574 = vmatmul.mubr.bf16.gmra.mxu0 %v454
        %v575 = vpop.f32.mrf.mxu0
        %v576 = vadd.f32 %v387, %v575
        %v577 = vpop.f32.mrf.mxu0
        %v578 = vpop.f32.mrf.mxu0
        %v579 = vadd.f32 %v387, %v578
        %v580 = vpop.f32.mrf.mxu0
        %581 = vmatprep.mubr.bf16.mxu0 0
        %582 = vmatmul.mubr.bf16.gmra.mxu0 %v455
        %v583 = vpop.f32.mrf.mxu0
        %v584 = vadd.f32 %v387, %v583
        %v585 = vpop.f32.mrf.mxu0
        %v586 = vpop.f32.mrf.mxu0
        %v587 = vadd.f32 %v387, %v586
        %v588 = vpop.f32.mrf.mxu0
        %589 = vmatprep.mubr.bf16.mxu0 0
        %590 = vmatmul.mubr.bf16.gmra.mxu0 %v456
        %v591 = vpop.f32.mrf.mxu0
        %v592 = vadd.f32 %v387, %v591
        %v593 = vpop.f32.mrf.mxu0
        %v594 = vpop.f32.mrf.mxu0
        %v595 = vadd.f32 %v387, %v594
        %v596 = vpop.f32.mrf.mxu0
        %597 = vmatprep.mubr.bf16.mxu0 0
        %598 = vmatmul.mubr.bf16.gmra.mxu0 %v457
        %v599 = vpop.f32.mrf.mxu0
        %v600 = vadd.f32 %v387, %v599
        %v601 = vpop.f32.mrf.mxu0
        %v602 = vpop.f32.mrf.mxu0
        %v603 = vadd.f32 %v387, %v602
        %v604 = vpop.f32.mrf.mxu0
        %605 = vmatprep.mubr.bf16.mxu0 0
        %606 = vmatmul.mubr.bf16.gmra.mxu0 %v458
        %v607 = vpop.f32.mrf.mxu0
        %v608 = vadd.f32 %v387, %v607
        %v609 = vpop.f32.mrf.mxu0
        %v610 = vpop.f32.mrf.mxu0
        %v611 = vadd.f32 %v387, %v610
        %v612 = vpop.f32.mrf.mxu0
        %613 = vmatprep.mubr.bf16.mxu0 0
        %614 = vmatmul.mubr.bf16.gmra.mxu0 %v459
        %v615 = vpop.f32.mrf.mxu0
        %v616 = vadd.f32 %v387, %v615
        %v617 = vpop.f32.mrf.mxu0
        %v618 = vpop.f32.mrf.mxu0
        %v619 = vadd.f32 %v387, %v618
        %v620 = vpop.f32.mrf.mxu0
        %621 = vmatprep.mubr.bf16.mxu0 0
        %622 = vmatmul.mubr.bf16.gmra.mxu0 %v460
        %v623 = vpop.f32.mrf.mxu0
        %v624 = vadd.f32 %v387, %v623
        %v625 = vpop.f32.mrf.mxu0
        %v626 = vpop.f32.mrf.mxu0
        %v627 = vadd.f32 %v387, %v626
        %v628 = vpop.f32.mrf.mxu0
        %629 = vmatprep.mubr.bf16.mxu0 0
        %630 = vmatmul.mubr.bf16.gmra.mxu0 %v461
        %v631 = vpop.f32.mrf.mxu0
        %v632 = vadd.f32 %v387, %v631
        %v633 = vpop.f32.mrf.mxu0
        %v634 = vpop.f32.mrf.mxu0
        %v635 = vadd.f32 %v387, %v634
        %v636 = vpop.f32.mrf.mxu0
        %637 = vmatprep.mubr.bf16.mxu0 0
        %638 = vmatmul.mubr.bf16.gmra.mxu0 %v462
        %v639 = vpop.f32.mrf.mxu0
        %v640 = vadd.f32 %v387, %v639
        %v641 = vpop.f32.mrf.mxu0
        %v642 = vpop.f32.mrf.mxu0
        %v643 = vadd.f32 %v387, %v642
        %v644 = vpop.f32.mrf.mxu0
        %645 = vmatprep.mubr.bf16.mxu0 0
        %646 = vmatmul.mubr.bf16.gmra.mxu0 %v463
        %v647 = vpop.f32.mrf.mxu0
        %v648 = vadd.f32 %v387, %v647
        %v649 = vpop.f32.mrf.mxu0
        %v650 = vpop.f32.mrf.mxu0
        %v651 = vadd.f32 %v387, %v650
        %v652 = vpop.f32.mrf.mxu0
        %653 = vmatprep.mubr.bf16.mxu0 0
        %654 = vmatmul.mubr.bf16.gmra.mxu0 %v464
        %v655 = vpop.f32.mrf.mxu0
        %v656 = vadd.f32 %v387, %v655
        %v657 = vpop.f32.mrf.mxu0
        %v658 = vpop.f32.mrf.mxu0
        %v659 = vadd.f32 %v387, %v658
        %v660 = vpop.f32.mrf.mxu0
        %661 = vmatprep.mubr.bf16.mxu0 0
        %662 = vmatmul.mubr.bf16.gmra.mxu0 %v465
        %v663 = vpop.f32.mrf.mxu0
        %v664 = vadd.f32 %v387, %v663
        %v665 = vpop.f32.mrf.mxu0
        %v666 = vpop.f32.mrf.mxu0
        %v667 = vadd.f32 %v387, %v666
        %v668 = vpop.f32.mrf.mxu0
        %669 = vmatprep.mubr.bf16.mxu0 0
        %670 = vmatmul.mubr.bf16.gmra.mxu0 %v466
        %v671 = vpop.f32.mrf.mxu0
        %v672 = vadd.f32 %v387, %v671
        %v673 = vpop.f32.mrf.mxu0
        %v674 = vpop.f32.mrf.mxu0
        %v675 = vadd.f32 %v387, %v674
        %v676 = vpop.f32.mrf.mxu0
        %677 = vmatprep.mubr.bf16.mxu0 0
        %678 = vmatmul.mubr.bf16.gmra.mxu0 %v467
        %v679 = vpop.f32.mrf.mxu0
        %v680 = vadd.f32 %v387, %v679
        %v681 = vpop.f32.mrf.mxu0
        %v682 = vpop.f32.mrf.mxu0
        %v683 = vadd.f32 %v387, %v682
        %v684 = vpop.f32.mrf.mxu0
        %685 = vmatprep.mubr.bf16.mxu0 0
        %686 = vmatmul.mubr.bf16.gmra.mxu0 %v468
        %v687 = vpop.f32.mrf.mxu0
        %v688 = vadd.f32 %v387, %v687
        %v689 = vpop.f32.mrf.mxu0
        %v690 = vpop.f32.mrf.mxu0
        %v691 = vadd.f32 %v387, %v690
        %v692 = vpop.f32.mrf.mxu0
        %693 = vdwg.mxu0
        %v694 = vpack.c.bf16 %v571, %v568
        %v695 = vpack.c.bf16 %v579, %v576
        %v696 = vpack.c.bf16 %v587, %v584
        %v697 = vpack.c.bf16 %v595, %v592
        %v698 = vpack.c.bf16 %v603, %v600
        %v699 = vpack.c.bf16 %v611, %v608
        %v700 = vpack.c.bf16 %v619, %v616
        %v701 = vpack.c.bf16 %v627, %v624
        %v702 = vpack.c.bf16 %v635, %v632
        %v703 = vpack.c.bf16 %v643, %v640
        %v704 = vpack.c.bf16 %v651, %v648
        %v705 = vpack.c.bf16 %v659, %v656
        %v706 = vpack.c.bf16 %v667, %v664
        %v707 = vpack.c.bf16 %v675, %v672
        %v708 = vpack.c.bf16 %v683, %v680
        %v709 = vpack.c.bf16 %v691, %v688
        %v726 = vunpack.c.l.b16 %v694
        %v727 = vunpack.c.h.b16 %v694
        %v728 = vunpack.c.l.b16 %v695
        %v729 = vunpack.c.h.b16 %v695
        %v730 = vunpack.c.l.b16 %v696
        %v731 = vunpack.c.h.b16 %v696
        %v732 = vunpack.c.l.b16 %v697
        %v733 = vunpack.c.h.b16 %v697
        %v734 = vunpack.c.l.b16 %v698
        %v735 = vunpack.c.h.b16 %v698
        %v736 = vunpack.c.l.b16 %v699
        %v737 = vunpack.c.h.b16 %v699
        %v738 = vunpack.c.l.b16 %v700
        %v739 = vunpack.c.h.b16 %v700
        %v740 = vunpack.c.l.b16 %v701
        %v741 = vunpack.c.h.b16 %v701
        %v742 = vunpack.c.l.b16 %v702
        %v743 = vunpack.c.h.b16 %v702
        %v744 = vunpack.c.l.b16 %v703
        %v745 = vunpack.c.h.b16 %v703
        %v746 = vunpack.c.l.b16 %v704
        %v747 = vunpack.c.h.b16 %v704
        %v748 = vunpack.c.l.b16 %v705
        %v749 = vunpack.c.h.b16 %v705
        %v750 = vunpack.c.l.b16 %v706
        %v751 = vunpack.c.h.b16 %v706
        %v752 = vunpack.c.l.b16 %v707
        %v753 = vunpack.c.h.b16 %v707
        %v754 = vunpack.c.l.b16 %v708
        %v755 = vunpack.c.h.b16 %v708
        %v756 = vunpack.c.l.b16 %v709
        %v757 = vunpack.c.h.b16 %v709
        %v758 = vpack.c.b16 %v726, %v726
        %v759 = vpack.c.b16 %v727, %v727
        %v760 = vpack.c.b16 %v728, %v728
        %v761 = vpack.c.b16 %v729, %v729
        %v762 = vpack.c.b16 %v730, %v730
        %v763 = vpack.c.b16 %v731, %v731
        %v764 = vpack.c.b16 %v732, %v732
        %v765 = vpack.c.b16 %v733, %v733
        %v766 = vpack.c.b16 %v734, %v734
        %v767 = vpack.c.b16 %v735, %v735
        %v768 = vpack.c.b16 %v736, %v736
        %v769 = vpack.c.b16 %v737, %v737
        %v770 = vpack.c.b16 %v738, %v738
        %v771 = vpack.c.b16 %v739, %v739
        %v772 = vpack.c.b16 %v740, %v740
        %v773 = vpack.c.b16 %v741, %v741
        %v774 = vpack.c.b16 %v742, %v742
        %v775 = vpack.c.b16 %v743, %v743
        %v776 = vpack.c.b16 %v744, %v744
        %v777 = vpack.c.b16 %v745, %v745
        %v778 = vpack.c.b16 %v746, %v746
        %v779 = vpack.c.b16 %v747, %v747
        %v780 = vpack.c.b16 %v748, %v748
        %v781 = vpack.c.b16 %v749, %v749
        %v782 = vpack.c.b16 %v750, %v750
        %v783 = vpack.c.b16 %v751, %v751
        %v784 = vpack.c.b16 %v752, %v752
        %v785 = vpack.c.b16 %v753, %v753
        %v786 = vpack.c.b16 %v754, %v754
        %v787 = vpack.c.b16 %v755, %v755
        %v788 = vpack.c.b16 %v756, %v756
        %v789 = vpack.c.b16 %v757, %v757
        %822 = vst [vmem:[%s322] sm:$0xf] %v758
        %823 = vst [vmem:[%s322 + $0x4] sm:$0xf] %v759
        %824 = vst [vmem:[%s322 + $0x8] sm:$0xf] %v760
        %825 = vst [vmem:[%s322 + $0xc] sm:$0xf] %v761
        %826 = vst [vmem:[%s322 + $0x10] sm:$0xf] %v762
        %827 = vst [vmem:[%s322 + $0x14] sm:$0xf] %v763
        %828 = vst [vmem:[%s322 + $0x18] sm:$0xf] %v764
        %829 = vst [vmem:[%s322 + $0x1c] sm:$0xf] %v765
        %830 = vst [vmem:[%s322 + $0x20] sm:$0xf] %v766
        %831 = vst [vmem:[%s322 + $0x24] sm:$0xf] %v767
        %832 = vst [vmem:[%s322 + $0x28] sm:$0xf] %v768
        %833 = vst [vmem:[%s322 + $0x2c] sm:$0xf] %v769
        %834 = vst [vmem:[%s322 + $0x30] sm:$0xf] %v770
        %835 = vst [vmem:[%s322 + $0x34] sm:$0xf] %v771
        %836 = vst [vmem:[%s322 + $0x38] sm:$0xf] %v772
        %837 = vst [vmem:[%s322 + $0x3c] sm:$0xf] %v773
        %838 = vst [vmem:[%s322 + $0x40] sm:$0xf] %v774
        %839 = vst [vmem:[%s322 + $0x44] sm:$0xf] %v775
        %840 = vst [vmem:[%s322 + $0x48] sm:$0xf] %v776
        %841 = vst [vmem:[%s322 + $0x4c] sm:$0xf] %v777
        %842 = vst [vmem:[%s322 + $0x50] sm:$0xf] %v778
        %843 = vst [vmem:[%s322 + $0x54] sm:$0xf] %v779
        %844 = vst [vmem:[%s322 + $0x58] sm:$0xf] %v780
        %845 = vst [vmem:[%s322 + $0x5c] sm:$0xf] %v781
        %846 = vst [vmem:[%s322 + $0x60] sm:$0xf] %v782
        %847 = vst [vmem:[%s322 + $0x64] sm:$0xf] %v783
        %848 = vst [vmem:[%s322 + $0x68] sm:$0xf] %v784
        %849 = vst [vmem:[%s322 + $0x6c] sm:$0xf] %v785
        %850 = vst [vmem:[%s322 + $0x70] sm:$0xf] %v786
        %851 = vst [vmem:[%s322 + $0x74] sm:$0xf] %v787
        %852 = vst [vmem:[%s322 + $0x78] sm:$0xf] %v788
        %853 = vst [vmem:[%s322 + $0x7c] sm:$0xf] %v789
        %v854 = vld [vmem:[#allocation7] sm:$0xf]
        %v855 = vld [vmem:[#allocation7 + $0x4] sm:$0xf]
        %v856 = vld [vmem:[#allocation7 + $0x8] sm:$0xf]
        %v857 = vld [vmem:[#allocation7 + $0xc] sm:$0xf]
        %v858 = vld [vmem:[#allocation7 + $0x10] sm:$0xf]
        %v859 = vld [vmem:[#allocation7 + $0x14] sm:$0xf]
        %v860 = vld [vmem:[#allocation7 + $0x18] sm:$0xf]
        %v861 = vld [vmem:[#allocation7 + $0x1c] sm:$0xf]
        %v862 = vld [vmem:[#allocation7 + $0x20] sm:$0xf]
        %v863 = vld [vmem:[#allocation7 + $0x24] sm:$0xf]
        %v864 = vld [vmem:[#allocation7 + $0x28] sm:$0xf]
        %v865 = vld [vmem:[#allocation7 + $0x2c] sm:$0xf]
        %v866 = vld [vmem:[#allocation7 + $0x30] sm:$0xf]
        %v867 = vld [vmem:[#allocation7 + $0x34] sm:$0xf]
        %v868 = vld [vmem:[#allocation7 + $0x38] sm:$0xf]
        %v869 = vld [vmem:[#allocation7 + $0x3c] sm:$0xf]
        %v870 = vld [vmem:[%s4] sm:$0x1]
        %v872 = vlaneseq
        %v873 = vshrl.u32 %v872, 7
        %v874 = vsub.s32 0, %v873
        %v875 = vrot.slane %v870, %v874
        %v893 = vunpack.c.l.b16 %v854
        %v894 = vunpack.c.l.b16 %v855
        %v895 = vunpack.c.l.b16 %v856
        %v896 = vunpack.c.l.b16 %v857
        %v897 = vunpack.c.l.b16 %v858
        %v898 = vunpack.c.l.b16 %v859
        %v899 = vunpack.c.l.b16 %v860
        %v900 = vunpack.c.l.b16 %v861
        %v901 = vunpack.c.l.b16 %v862
        %v902 = vunpack.c.l.b16 %v863
        %v903 = vunpack.c.l.b16 %v864
        %v904 = vunpack.c.l.b16 %v865
        %v905 = vunpack.c.l.b16 %v866
        %v906 = vunpack.c.l.b16 %v867
        %v907 = vunpack.c.l.b16 %v868
        %v908 = vunpack.c.l.b16 %v869
        %v909 = vpack.c.b16 %v894, %v893
        %v910 = vpack.c.b16 %v896, %v895
        %v911 = vpack.c.b16 %v898, %v897
        %v912 = vpack.c.b16 %v900, %v899
        %v913 = vpack.c.b16 %v902, %v901
        %v914 = vpack.c.b16 %v904, %v903
        %v915 = vpack.c.b16 %v906, %v905
        %v916 = vpack.c.b16 %v908, %v907
        %925 = vmatprep.subr.bf16.mxu0 0
        %926 = vmatpush1.bf16.msra.mxu0 %v916
        %927 = vmatprep.subr.bf16.mxu0 0
        %928 = vmatpush1.bf16.msra.mxu0 %v915
        %929 = vmatprep.subr.bf16.mxu0 0
        %930 = vmatpush1.bf16.msra.mxu0 %v914
        %931 = vmatprep.subr.bf16.mxu0 0
        %932 = vmatpush1.bf16.msra.mxu0 %v913
        %933 = vmatprep.subr.bf16.mxu0 0
        %934 = vmatpush1.bf16.msra.mxu0 %v912
        %935 = vmatprep.subr.bf16.mxu0 0
        %936 = vmatpush1.bf16.msra.mxu0 %v911
        %937 = vmatprep.subr.bf16.mxu0 0
        %938 = vmatpush1.bf16.msra.mxu0 %v910
        %939 = vmatprep.subr.bf16.mxu0 0
        %940 = vmatpush1.bf16.msra.mxu0 %v909
        %941 = vmatprep.subr.bf16.mxu0 0
        %942 = vmatpush2.bf16.msra.mxu0 0
        %943 = vmatprep.subr.bf16.mxu0 0
        %944 = vmatpush2.bf16.msra.mxu0 0
        %945 = vmatprep.subr.bf16.mxu0 0
        %946 = vmatpush2.bf16.msra.mxu0 0
        %947 = vmatprep.subr.bf16.mxu0 0
        %948 = vmatpush2.bf16.msra.mxu0 0
        %949 = vmatprep.subr.bf16.mxu0 0
        %950 = vmatpush2.bf16.msra.mxu0 0
        %951 = vmatprep.subr.bf16.mxu0 0
        %952 = vmatpush2.bf16.msra.mxu0 0
        %953 = vmatprep.subr.bf16.mxu0 0
        %954 = vmatpush2.bf16.msra.mxu0 0
        %955 = vmatprep.subr.bf16.mxu0 0
        %956 = vmatpush2.bf16.msra.mxu0 0
        %957 = vmatprep.mubr.bf16.mxu0 0
        %958 = vmatmul.mubr.bf16.gmra.mxu0 %v453
        %v959 = vpop.f32.mrf.mxu0
        %v960 = vadd.f32 %v875, %v959
        %v961 = vpop.f32.mrf.mxu0
        %v962 = vpop.f32.mrf.mxu0
        %v963 = vadd.f32 %v875, %v962
        %v964 = vpop.f32.mrf.mxu0
        %965 = vmatprep.mubr.bf16.mxu0 0
        %966 = vmatmul.mubr.bf16.gmra.mxu0 %v454
        %v967 = vpop.f32.mrf.mxu0
        %v968 = vadd.f32 %v875, %v967
        %v969 = vpop.f32.mrf.mxu0
        %v970 = vpop.f32.mrf.mxu0
        %v971 = vadd.f32 %v875, %v970
        %v972 = vpop.f32.mrf.mxu0
        %973 = vmatprep.mubr.bf16.mxu0 0
        %974 = vmatmul.mubr.bf16.gmra.mxu0 %v455
        %v975 = vpop.f32.mrf.mxu0
        %v976 = vadd.f32 %v875, %v975
        %v977 = vpop.f32.mrf.mxu0
        %v978 = vpop.f32.mrf.mxu0
        %v979 = vadd.f32 %v875, %v978
        %v980 = vpop.f32.mrf.mxu0
        %981 = vmatprep.mubr.bf16.mxu0 0
        %982 = vmatmul.mubr.bf16.gmra.mxu0 %v456
        %v983 = vpop.f32.mrf.mxu0
        %v984 = vadd.f32 %v875, %v983
        %v985 = vpop.f32.mrf.mxu0
        %v986 = vpop.f32.mrf.mxu0
        %v987 = vadd.f32 %v875, %v986
        %v988 = vpop.f32.mrf.mxu0
        %989 = vmatprep.mubr.bf16.mxu0 0
        %990 = vmatmul.mubr.bf16.gmra.mxu0 %v457
        %v991 = vpop.f32.mrf.mxu0
        %v992 = vadd.f32 %v875, %v991
        %v993 = vpop.f32.mrf.mxu0
        %v994 = vpop.f32.mrf.mxu0
        %v995 = vadd.f32 %v875, %v994
        %v996 = vpop.f32.mrf.mxu0
        %997 = vmatprep.mubr.bf16.mxu0 0
        %998 = vmatmul.mubr.bf16.gmra.mxu0 %v458
        %v999 = vpop.f32.mrf.mxu0
        %v1000 = vadd.f32 %v875, %v999
        %v1001 = vpop.f32.mrf.mxu0
        %v1002 = vpop.f32.mrf.mxu0
        %v1003 = vadd.f32 %v875, %v1002
        %v1004 = vpop.f32.mrf.mxu0
        %1005 = vmatprep.mubr.bf16.mxu0 0
        %1006 = vmatmul.mubr.bf16.gmra.mxu0 %v459
        %v1007 = vpop.f32.mrf.mxu0
        %v1008 = vadd.f32 %v875, %v1007
        %v1009 = vpop.f32.mrf.mxu0
        %v1010 = vpop.f32.mrf.mxu0
        %v1011 = vadd.f32 %v875, %v1010
        %v1012 = vpop.f32.mrf.mxu0
        %1013 = vmatprep.mubr.bf16.mxu0 0
        %1014 = vmatmul.mubr.bf16.gmra.mxu0 %v460
        %v1015 = vpop.f32.mrf.mxu0
        %v1016 = vadd.f32 %v875, %v1015
        %v1017 = vpop.f32.mrf.mxu0
        %v1018 = vpop.f32.mrf.mxu0
        %v1019 = vadd.f32 %v875, %v1018
        %v1020 = vpop.f32.mrf.mxu0
        %1021 = vmatprep.mubr.bf16.mxu0 0
        %1022 = vmatmul.mubr.bf16.gmra.mxu0 %v461
        %v1023 = vpop.f32.mrf.mxu0
        %v1024 = vadd.f32 %v875, %v1023
        %v1025 = vpop.f32.mrf.mxu0
        %v1026 = vpop.f32.mrf.mxu0
        %v1027 = vadd.f32 %v875, %v1026
        %v1028 = vpop.f32.mrf.mxu0
        %1029 = vmatprep.mubr.bf16.mxu0 0
        %1030 = vmatmul.mubr.bf16.gmra.mxu0 %v462
        %v1031 = vpop.f32.mrf.mxu0
        %v1032 = vadd.f32 %v875, %v1031
        %v1033 = vpop.f32.mrf.mxu0
        %v1034 = vpop.f32.mrf.mxu0
        %v1035 = vadd.f32 %v875, %v1034
        %v1036 = vpop.f32.mrf.mxu0
        %1037 = vmatprep.mubr.bf16.mxu0 0
        %1038 = vmatmul.mubr.bf16.gmra.mxu0 %v463
        %v1039 = vpop.f32.mrf.mxu0
        %v1040 = vadd.f32 %v875, %v1039
        %v1041 = vpop.f32.mrf.mxu0
        %v1042 = vpop.f32.mrf.mxu0
        %v1043 = vadd.f32 %v875, %v1042
        %v1044 = vpop.f32.mrf.mxu0
        %1045 = vmatprep.mubr.bf16.mxu0 0
        %1046 = vmatmul.mubr.bf16.gmra.mxu0 %v464
        %v1047 = vpop.f32.mrf.mxu0
        %v1048 = vadd.f32 %v875, %v1047
        %v1049 = vpop.f32.mrf.mxu0
        %v1050 = vpop.f32.mrf.mxu0
        %v1051 = vadd.f32 %v875, %v1050
        %v1052 = vpop.f32.mrf.mxu0
        %1053 = vmatprep.mubr.bf16.mxu0 0
        %1054 = vmatmul.mubr.bf16.gmra.mxu0 %v465
        %v1055 = vpop.f32.mrf.mxu0
        %v1056 = vadd.f32 %v875, %v1055
        %v1057 = vpop.f32.mrf.mxu0
        %v1058 = vpop.f32.mrf.mxu0
        %v1059 = vadd.f32 %v875, %v1058
        %v1060 = vpop.f32.mrf.mxu0
        %1061 = vmatprep.mubr.bf16.mxu0 0
        %1062 = vmatmul.mubr.bf16.gmra.mxu0 %v466
        %v1063 = vpop.f32.mrf.mxu0
        %v1064 = vadd.f32 %v875, %v1063
        %v1065 = vpop.f32.mrf.mxu0
        %v1066 = vpop.f32.mrf.mxu0
        %v1067 = vadd.f32 %v875, %v1066
        %v1068 = vpop.f32.mrf.mxu0
        %1069 = vmatprep.mubr.bf16.mxu0 0
        %1070 = vmatmul.mubr.bf16.gmra.mxu0 %v467
        %v1071 = vpop.f32.mrf.mxu0
        %v1072 = vadd.f32 %v875, %v1071
        %v1073 = vpop.f32.mrf.mxu0
        %v1074 = vpop.f32.mrf.mxu0
        %v1075 = vadd.f32 %v875, %v1074
        %v1076 = vpop.f32.mrf.mxu0
        %1077 = vmatprep.mubr.bf16.mxu0 0
        %1078 = vmatmul.mubr.bf16.gmra.mxu0 %v468
        %v1079 = vpop.f32.mrf.mxu0
        %v1080 = vadd.f32 %v875, %v1079
        %v1081 = vpop.f32.mrf.mxu0
        %v1082 = vpop.f32.mrf.mxu0
        %v1083 = vadd.f32 %v875, %v1082
        %v1084 = vpop.f32.mrf.mxu0
        %1085 = vdwg.mxu0
        %v1086 = vpack.c.bf16 %v963, %v960
        %v1087 = vpack.c.bf16 %v971, %v968
        %v1088 = vpack.c.bf16 %v979, %v976
        %v1089 = vpack.c.bf16 %v987, %v984
        %v1090 = vpack.c.bf16 %v995, %v992
        %v1091 = vpack.c.bf16 %v1003, %v1000
        %v1092 = vpack.c.bf16 %v1011, %v1008
        %v1093 = vpack.c.bf16 %v1019, %v1016
        %v1094 = vpack.c.bf16 %v1027, %v1024
        %v1095 = vpack.c.bf16 %v1035, %v1032
        %v1096 = vpack.c.bf16 %v1043, %v1040
        %v1097 = vpack.c.bf16 %v1051, %v1048
        %v1098 = vpack.c.bf16 %v1059, %v1056
        %v1099 = vpack.c.bf16 %v1067, %v1064
        %v1100 = vpack.c.bf16 %v1075, %v1072
        %v1101 = vpack.c.bf16 %v1083, %v1080
        %v1118 = vunpack.c.l.b16 %v1086
        %v1119 = vunpack.c.h.b16 %v1086
        %v1120 = vunpack.c.l.b16 %v1087
        %v1121 = vunpack.c.h.b16 %v1087
        %v1122 = vunpack.c.l.b16 %v1088
        %v1123 = vunpack.c.h.b16 %v1088
        %v1124 = vunpack.c.l.b16 %v1089
        %v1125 = vunpack.c.h.b16 %v1089
        %v1126 = vunpack.c.l.b16 %v1090
        %v1127 = vunpack.c.h.b16 %v1090
        %v1128 = vunpack.c.l.b16 %v1091
        %v1129 = vunpack.c.h.b16 %v1091
        %v1130 = vunpack.c.l.b16 %v1092
        %v1131 = vunpack.c.h.b16 %v1092
        %v1132 = vunpack.c.l.b16 %v1093
        %v1133 = vunpack.c.h.b16 %v1093
        %v1134 = vunpack.c.l.b16 %v1094
        %v1135 = vunpack.c.h.b16 %v1094
        %v1136 = vunpack.c.l.b16 %v1095
        %v1137 = vunpack.c.h.b16 %v1095
        %v1138 = vunpack.c.l.b16 %v1096
        %v1139 = vunpack.c.h.b16 %v1096
        %v1140 = vunpack.c.l.b16 %v1097
        %v1141 = vunpack.c.h.b16 %v1097
        %v1142 = vunpack.c.l.b16 %v1098
        %v1143 = vunpack.c.h.b16 %v1098
        %v1144 = vunpack.c.l.b16 %v1099
        %v1145 = vunpack.c.h.b16 %v1099
        %v1146 = vunpack.c.l.b16 %v1100
        %v1147 = vunpack.c.h.b16 %v1100
        %v1148 = vunpack.c.l.b16 %v1101
        %v1149 = vunpack.c.h.b16 %v1101
        %v1150 = vpack.c.b16 %v1118, %v1118
        %v1151 = vpack.c.b16 %v1119, %v1119
        %v1152 = vpack.c.b16 %v1120, %v1120
        %v1153 = vpack.c.b16 %v1121, %v1121
        %v1154 = vpack.c.b16 %v1122, %v1122
        %v1155 = vpack.c.b16 %v1123, %v1123
        %v1156 = vpack.c.b16 %v1124, %v1124
        %v1157 = vpack.c.b16 %v1125, %v1125
        %v1158 = vpack.c.b16 %v1126, %v1126
        %v1159 = vpack.c.b16 %v1127, %v1127
        %v1160 = vpack.c.b16 %v1128, %v1128
        %v1161 = vpack.c.b16 %v1129, %v1129
        %v1162 = vpack.c.b16 %v1130, %v1130
        %v1163 = vpack.c.b16 %v1131, %v1131
        %v1164 = vpack.c.b16 %v1132, %v1132
        %v1165 = vpack.c.b16 %v1133, %v1133
        %v1166 = vpack.c.b16 %v1134, %v1134
        %v1167 = vpack.c.b16 %v1135, %v1135
        %v1168 = vpack.c.b16 %v1136, %v1136
        %v1169 = vpack.c.b16 %v1137, %v1137
        %v1170 = vpack.c.b16 %v1138, %v1138
        %v1171 = vpack.c.b16 %v1139, %v1139
        %v1172 = vpack.c.b16 %v1140, %v1140
        %v1173 = vpack.c.b16 %v1141, %v1141
        %v1174 = vpack.c.b16 %v1142, %v1142
        %v1175 = vpack.c.b16 %v1143, %v1143
        %v1176 = vpack.c.b16 %v1144, %v1144
        %v1177 = vpack.c.b16 %v1145, %v1145
        %v1178 = vpack.c.b16 %v1146, %v1146
        %v1179 = vpack.c.b16 %v1147, %v1147
        %v1180 = vpack.c.b16 %v1148, %v1148
        %v1181 = vpack.c.b16 %v1149, %v1149
        %1214 = vst [vmem:[%s329] sm:$0xf] %v1150
        %1215 = vst [vmem:[%s329 + $0x4] sm:$0xf] %v1151
        %1216 = vst [vmem:[%s329 + $0x8] sm:$0xf] %v1152
        %1217 = vst [vmem:[%s329 + $0xc] sm:$0xf] %v1153
        %1218 = vst [vmem:[%s329 + $0x10] sm:$0xf] %v1154
        %1219 = vst [vmem:[%s329 + $0x14] sm:$0xf] %v1155
        %1220 = vst [vmem:[%s329 + $0x18] sm:$0xf] %v1156
        %1221 = vst [vmem:[%s329 + $0x1c] sm:$0xf] %v1157
        %1222 = vst [vmem:[%s329 + $0x20] sm:$0xf] %v1158
        %1223 = vst [vmem:[%s329 + $0x24] sm:$0xf] %v1159
        %1224 = vst [vmem:[%s329 + $0x28] sm:$0xf] %v1160
        %1225 = vst [vmem:[%s329 + $0x2c] sm:$0xf] %v1161
        %1226 = vst [vmem:[%s329 + $0x30] sm:$0xf] %v1162
        %1227 = vst [vmem:[%s329 + $0x34] sm:$0xf] %v1163
        %1228 = vst [vmem:[%s329 + $0x38] sm:$0xf] %v1164
        %1229 = vst [vmem:[%s329 + $0x3c] sm:$0xf] %v1165
        %1230 = vst [vmem:[%s329 + $0x40] sm:$0xf] %v1166
        %1231 = vst [vmem:[%s329 + $0x44] sm:$0xf] %v1167
        %1232 = vst [vmem:[%s329 + $0x48] sm:$0xf] %v1168
        %1233 = vst [vmem:[%s329 + $0x4c] sm:$0xf] %v1169
        %1234 = vst [vmem:[%s329 + $0x50] sm:$0xf] %v1170
        %1235 = vst [vmem:[%s329 + $0x54] sm:$0xf] %v1171
        %1236 = vst [vmem:[%s329 + $0x58] sm:$0xf] %v1172
        %1237 = vst [vmem:[%s329 + $0x5c] sm:$0xf] %v1173
        %1238 = vst [vmem:[%s329 + $0x60] sm:$0xf] %v1174
        %1239 = vst [vmem:[%s329 + $0x64] sm:$0xf] %v1175
        %1240 = vst [vmem:[%s329 + $0x68] sm:$0xf] %v1176
        %1241 = vst [vmem:[%s329 + $0x6c] sm:$0xf] %v1177
        %1242 = vst [vmem:[%s329 + $0x70] sm:$0xf] %v1178
        %1243 = vst [vmem:[%s329 + $0x74] sm:$0xf] %v1179
        %1244 = vst [vmem:[%s329 + $0x78] sm:$0xf] %v1180
        %1245 = vst [vmem:[%s329 + $0x7c] sm:$0xf] %v1181
        %s1246 = sand.u32 %s162, 1
        %s1247 = scalar_lea.sflag [#allocation4], %s1246
        %s1248 = sand.u32 %s162, 1
        %s1249 = smul.addr %s1248, 128
        %s1250 = scalar_lea.vmem [#allocation8], %s1249
        %s1251 = sand.u32 %s190, 1
        %s1252 = scalar_lea.sflag [#allocation10], %s1251
        %s1253 = sand.u32 %s190, 1
        %s1254 = smul.addr %s1253, 128
        %s1255 = scalar_lea.vmem [#allocation9], %s1254
        // Predicated region
        $region53: #{tpu_custom_call.1} parent=39 // pred_check
          %p1256 = pneg %p172
        $region54: #{tpu_custom_call.1} parent=39 // pred_check_branch
          %1258 = sbr.rel (%p1256) target = $region56
        $region55: #{tpu_custom_call.1} parent=39 // pred_region
          %s1259 = smul.u32 32, %s33
          %s1261 = ssub.s32 2048, 2048
          %1262 = vsyncadd %s1247, %s1261
          %s1263 = smul.addr %s32, 32
          %s1264 = sadd.s32 %s1259, %s1263
          %s1265 = smul.addr %s1264, 64
          %s1266 = scalar_lea.hbm %s5, %s1265
          %s1267 = sshll.u32 %s1250, 4
          %s1268 = int_to_ptr.vmem [resolvable:$true] %s1267
          %1273 = dma.vmem_to_hbm [thread:$0]  %s1268, 2048, %s1266, %s1247, 64, 64, 4
        $region56: #{tpu_custom_call.1} parent=39 // pred_fallthru
          _
        // Predicated region
        $region57: #{tpu_custom_call.1} parent=39 // pred_check
          %p1274 = pneg %p200
        $region58: #{tpu_custom_call.1} parent=39 // pred_check_branch
          %1276 = sbr.rel (%p1274) target = $region60
        $region59: #{tpu_custom_call.1} parent=39 // pred_region
          %s1277 = smul.u32 32, %s33
          %s1279 = ssub.s32 2048, 2048
          %1280 = vsyncadd %s1252, %s1279
          %s1281 = smul.addr %s32, 32
          %s1282 = sadd.s32 %s1277, %s1281
          %s1283 = smul.addr %s1282, 64
          %s1284 = scalar_lea.hbm %s6, %s1283
          %s1285 = sshll.u32 %s1255, 4
          %s1286 = int_to_ptr.vmem [resolvable:$true] %s1285
          %1291 = dma.vmem_to_hbm [thread:$0]  %s1286, 2048, %s1284, %s1252, 64, 64, 4
        $region60: #{tpu_custom_call.1} parent=39 // pred_fallthru
          _
      $region40: #{tpu_custom_call.1} parent=5 // pred_fallthru
        _
      %p1292 = scmp.le.s32.totalorder 2, %s23
      // Predicated region
      $region61: #{tpu_custom_call.1} parent=5 // pred_check
        %p1293 = pneg %p1292
      $region62: #{tpu_custom_call.1} parent=5 // pred_check_branch
        %1295 = sbr.rel (%p1293) target = $region64
      $region63: #{tpu_custom_call.1} parent=5 // pred_region
        %s1296 = ssub.s32 %s23, 2
        // Predicated region
        $region65: #{tpu_custom_call.1} parent=63 // pred_check
          %p1297 = pneg %p178
        $region66: #{tpu_custom_call.1} parent=63 // pred_check_branch
          %1299 = sbr.rel (%p1297) target = $region68
        $region67: #{tpu_custom_call.1} parent=63 // pred_region
          %s1300 = sand.u32 %s163, 1
          %s1301 = scalar_lea.sflag [#allocation4], %s1300
          %s1302 = sand.u32 %s163, 1
          %s1303 = smul.addr %s1302, 128
          %s1304 = scalar_lea.vmem [#allocation8], %s1303
          %1305 = dma.done %s1301, 2048
        $region68: #{tpu_custom_call.1} parent=63 // pred_fallthru
          _
        // Predicated region
        $region69: #{tpu_custom_call.1} parent=63 // pred_check
          %p1306 = pneg %p206
        $region70: #{tpu_custom_call.1} parent=63 // pred_check_branch
          %1308 = sbr.rel (%p1306) target = $region72
        $region71: #{tpu_custom_call.1} parent=63 // pred_region
          %s1309 = sand.u32 %s191, 1
          %s1310 = scalar_lea.sflag [#allocation10], %s1309
          %s1311 = sand.u32 %s191, 1
          %s1312 = smul.addr %s1311, 128
          %s1313 = scalar_lea.vmem [#allocation9], %s1312
          %1314 = dma.done %s1310, 2048
        $region72: #{tpu_custom_call.1} parent=63 // pred_fallthru
          _
      $region64: #{tpu_custom_call.1} parent=5 // pred_fallthru
        _
    $region6: #{tpu_custom_call.1} parent=1 // loop_footer
      %s27 = sadd.s32 1, %s23
    $region7: #{tpu_custom_call.1} parent=1 // loop_footer_branch
      %22 = sbr.rel target = $region3
    $region8: #{tpu_custom_call.1} parent=1 // loop_exit
      _
    %1315 = vsyncpa [#allocation3], 1
    %s1316 = scalar_lea.sflag [#allocation3], 1
    %1317 = vsyncpa %s1316, 1
    %1318 = vsyncpa [#allocation6], 1
    %1319 = vsyncpa [#allocation4], 1
    %s1320 = scalar_lea.sflag [#allocation4], 1
    %1321 = vsyncpa %s1320, 1
    %1322 = vsyncpa [#allocation10], 1
    %s1323 = scalar_lea.sflag [#allocation10], 1
    %1324 = vsyncpa %s1323, 1

// kernel: tpu_custom_call.1
$region0: #{tpu_custom_call.1}
  #allocation0 [shape = 'u32[]', space=smem, size = 0x4, offset = 0x4, fixed_abs, tag = 'smem constant byte address 0x4 - core index']
  #allocation1 [shape = 'u32[144,128]{1,0:T(1,128)}', space=vmem, size = 0x12000, scoped, tag = 'internal scratch']
  %s0 = inlined_call_operand.hbm [shape: bf16[2,256,128], index: 0, kind: input, shape index: {}]
  %s1 = inlined_call_operand.hbm [shape: bf16[128,128], index: 1, kind: input, shape index: {}]
  %s2 = inlined_call_operand.vmem [shape: f32[1,128], index: 2, kind: input, shape index: {}]
  %s3 = inlined_call_operand.hbm [shape: bf16[128,128], index: 3, kind: input, shape index: {}]
  %s4 = inlined_call_operand.vmem [shape: f32[1,128], index: 4, kind: input, shape index: {}]
  %s5 = inlined_call_operand.hbm [shape: bf16[2,256,128], index: 5, kind: output, shape index: {0}]
  %s6 = inlined_call_operand.hbm [shape: bf16[2,256,128], index: 6, kind: output, shape index: {1}]
  %7 = xla_tuple %s5, %s6
  %s8 = sld [smem:[#allocation0]]
  $region73: #{tpu_custom_call.1} parent=0
    _
  %s10 = ssub.s32 1, %s8
  %s11 = scalar_select 0, %s10, %s8
  $region1: #{tpu_custom_call.1} parent=0
    #allocation2 [shape = 'u8[131072]{0}', space=vmem, size = 0x20000, scoped, tag = 'input window, operand 0']
    #allocation3 [shape = 's32[2]{0}', space=sflag, size = 0x8, scoped, tag = 'scoped memory for tpu_custom_call.1']
    #allocation4 [shape = 's32[2]{0}', space=sflag, size = 0x8, scoped, tag = 'scoped memory for tpu_custom_call.1']
    #allocation5 [shape = 'u8[32768]{0}', space=vmem, size = 0x8000, scoped, tag = 'input window, operand 1, single buffered']
    #allocation6 [shape = 's32[1]{0}', space=sflag, size = 0x4, scoped, tag = 'scoped memory for tpu_custom_call.1']
    #allocation7 [shape = 'u8[32768]{0}', space=vmem, size = 0x8000, scoped, tag = 'input window, operand 3, single buffered']
    #allocation8 [shape = 'u8[131072]{0}', space=vmem, size = 0x20000, scoped, tag = 'output window, operand 0']
    #allocation9 [shape = 'u8[131072]{0}', space=vmem, size = 0x20000, scoped, tag = 'output window, operand 1']
    #allocation10 [shape = 's32[2]{0}', space=sflag, size = 0x8, scoped, tag = 'scoped memory for tpu_custom_call.1']
    %12 = vsyncpa [#allocation3], 0
    %s13 = scalar_lea.sflag [#allocation3], 1
    %14 = vsyncpa %s13, 0
    %15 = vsyncpa [#allocation6], 0
    %16 = vsyncpa [#allocation4], 0
    %s17 = scalar_lea.sflag [#allocation4], 1
    %18 = vsyncpa %s17, 0
    %19 = vsyncpa [#allocation10], 0
    %s20 = scalar_lea.sflag [#allocation10], 1
    %21 = vsyncpa %s20, 0
    loop: start=0, step=1, limit=4
    $region2: #{tpu_custom_call.1} parent=1 // loop_pre_header
      _
    $region3: #{tpu_custom_call.1} parent=1 // loop_header
      %s23 = sphi 0, %s27
      %p24 = scmp.ge.s32.totalorder %s23, 4
      %s30 = sphi 0, %s42
      %s31 = sphi 0, %s38
      %s32 = sphi 0, %s30
      %s33 = sphi 0, %s31
      %s34 = sphi 0, %s32
      %s35 = sphi 0, %s33
      %s47 = sphi 0, %s49
      %s50 = sphi 0, %s47
      %s51 = sphi 0, %s50
      %s67 = sphi 0, %s51
      %s71 = sphi 0, %s71
      %s73 = sphi 0, %s71
      %s74 = sphi 0, %s73
      %s88 = sphi 0, %s74
      %s92 = sphi 0, %s92
      %s94 = sphi 0, %s92
      %s95 = sphi 0, %s94
      %s109 = sphi 0, %s95
      %s113 = sphi 0, %s113
      %s115 = sphi 0, %s113
      %s116 = sphi 0, %s115
      %s130 = sphi 0, %s116
      %s134 = sphi 0, %s134
      %s136 = sphi 0, %s134
      %s137 = sphi 0, %s136
      %s151 = sphi 0, %s137
      %s159 = sphi 0, %s161
      %s162 = sphi 0, %s159
      %s163 = sphi 0, %s162
      %s179 = sphi 0, %s163
      %s187 = sphi 0, %s189
      %s190 = sphi 0, %s187
      %s191 = sphi 0, %s190
      %s207 = sphi 0, %s191
    $region4: #{tpu_custom_call.1} parent=1 // loop_header_branch
      %26 = sbr.rel (%p24) target = $region8
    $region5: #{tpu_custom_call.1} parent=1 // loop_body
      %s28 = ssub.s32 %s23, 1
      %s29 = ssub.s32 %s23, 2
      %s36 = sadd.s32 1, %s31
      %p37 = scmp.ge.s32.totalorder %s36, 1
      %s38 = scalar_select %p37, 0, %s36
      %s39 = sadd.s32 1, %s30
      %s40 = scalar_select %p37, %s39, %s30
      %p41 = scmp.ge.s32.totalorder %s40, 2
      %s42 = scalar_select %p41, 0, %s40
      %s43 = ssub.s32 %s30, %s42
      %s44 = ssub.s32 %s31, %s38
      %s45 = sor.u32 %s43, %s44
      %p46 = scmp.eq.s32.totalorder %s45, 0
      %s48 = sadd.s32 %s47, 1
      %s49 = scalar_select %p46, %s47, %s48
      %p52 = pneg %p46
      %p53 = scmp.eq.s32.totalorder %s23, 1
      %p54 = por %p52, %p53
      %p55 = scmp.ne.s32.totalorder %s47, %s50
      %p56 = scmp.eq.s32.totalorder %s23, 0
      %p57 = por %p55, %p56
      %p58 = scmp.ne.s32.totalorder %s47, %s50
      %p59 = scmp.eq.s32.totalorder %s28, 1
      %p60 = por %p58, %p59
      %p61 = scmp.ne.s32.totalorder %s50, %s51
      %p62 = scmp.eq.s32.totalorder %s28, 0
      %p63 = por %p61, %p62
      %p64 = scmp.ne.s32.totalorder %s50, %s51
      %p65 = scmp.eq.s32.totalorder %s29, 1
      %p66 = por %p64, %p65
      %p68 = scmp.ne.s32.totalorder %s51, %s67
      %p69 = scmp.eq.s32.totalorder %s29, 0
      %p70 = por %p68, %p69
      %s72 = sadd.s32 %s71, 1
      %p75 = scmp.eq.s32.totalorder %s23, 1
      %p76 = scmp.ne.s32.totalorder %s71, %s73
      %p77 = scmp.eq.s32.totalorder %s23, 0
      %p78 = por %p76, %p77
      %p79 = scmp.ne.s32.totalorder %s71, %s73
      %p80 = scmp.eq.s32.totalorder %s28, 1
      %p81 = por %p79, %p80
      %p82 = scmp.ne.s32.totalorder %s73, %s74
      %p83 = scmp.eq.s32.totalorder %s28, 0
      %p84 = por %p82, %p83
      %p85 = scmp.ne.s32.totalorder %s73, %s74
      %p86 = scmp.eq.s32.totalorder %s29, 1
      %p87 = por %p85, %p86
      %p89 = scmp.ne.s32.totalorder %s74, %s88
      %p90 = scmp.eq.s32.totalorder %s29, 0
      %p91 = por %p89, %p90
      %s93 = sadd.s32 %s92, 1
      %p96 = scmp.eq.s32.totalorder %s23, 1
      %p97 = scmp.ne.s32.totalorder %s92, %s94
      %p98 = scmp.eq.s32.totalorder %s23, 0
      %p99 = por %p97, %p98
      %p100 = scmp.ne.s32.totalorder %s92, %s94
      %p101 = scmp.eq.s32.totalorder %s28, 1
      %p102 = por %p100, %p101
      %p103 = scmp.ne.s32.totalorder %s94, %s95
      %p104 = scmp.eq.s32.totalorder %s28, 0
      %p105 = por %p103, %p104
      %p106 = scmp.ne.s32.totalorder %s94, %s95
      %p107 = scmp.eq.s32.totalorder %s29, 1
      %p108 = por %p106, %p107
      %p110 = scmp.ne.s32.totalorder %s95, %s109
      %p111 = scmp.eq.s32.totalorder %s29, 0
      %p112 = por %p110, %p111
      %s114 = sadd.s32 %s113, 1
      %p117 = scmp.eq.s32.totalorder %s23, 1
      %p118 = scmp.ne.s32.totalorder %s113, %s115
      %p119 = scmp.eq.s32.totalorder %s23, 0
      %p120 = por %p118, %p119
      %p121 = scmp.ne.s32.totalorder %s113, %s115
      %p122 = scmp.eq.s32.totalorder %s28, 1
      %p123 = por %p121, %p122
      %p124 = scmp.ne.s32.totalorder %s115, %s116
      %p125 = scmp.eq.s32.totalorder %s28, 0
      %p126 = por %p124, %p125
      %p127 = scmp.ne.s32.totalorder %s115, %s116
      %p128 = scmp.eq.s32.totalorder %s29, 1
      %p129 = por %p127, %p128
      %p131 = scmp.ne.s32.totalorder %s116, %s130
      %p132 = scmp.eq.s32.totalorder %s29, 0
      %p133 = por %p131, %p132
      %s135 = sadd.s32 %s134, 1
      %p138 = scmp.eq.s32.totalorder %s23, 1
      %p139 = scmp.ne.s32.totalorder %s134, %s136
      %p140 = scmp.eq.s32.totalorder %s23, 0
      %p141 = por %p139, %p140
      %p142 = scmp.ne.s32.totalorder %s134, %s136
      %p143 = scmp.eq.s32.totalorder %s28, 1
      %p144 = por %p142, %p143
      %p145 = scmp.ne.s32.totalorder %s136, %s137
      %p146 = scmp.eq.s32.totalorder %s28, 0
      %p147 = por %p145, %p146
      %p148 = scmp.ne.s32.totalorder %s136, %s137
      %p149 = scmp.eq.s32.totalorder %s29, 1
      %p150 = por %p148, %p149
      %p152 = scmp.ne.s32.totalorder %s137, %s151
      %p153 = scmp.eq.s32.totalorder %s29, 0
      %p154 = por %p152, %p153
      %s155 = ssub.s32 %s30, %s42
      %s156 = ssub.s32 %s31, %s38
      %s157 = sor.u32 %s155, %s156
      %p158 = scmp.eq.s32.totalorder %s157, 0
      %s160 = sadd.s32 %s159, 1
      %s161 = scalar_select %p158, %s159, %s160
      %p164 = pneg %p158
      %p165 = scmp.eq.s32.totalorder %s23, 1
      %p166 = por %p164, %p165
      %p167 = scmp.ne.s32.totalorder %s159, %s162
      %p168 = scmp.eq.s32.totalorder %s23, 0
      %p169 = por %p167, %p168
      %p170 = scmp.ne.s32.totalorder %s159, %s162
      %p171 = scmp.eq.s32.totalorder %s28, 1
      %p172 = por %p170, %p171
      %p173 = scmp.ne.s32.totalorder %s162, %s163
      %p174 = scmp.eq.s32.totalorder %s28, 0
      %p175 = por %p173, %p174
      %p176 = scmp.ne.s32.totalorder %s162, %s163
      %p177 = scmp.eq.s32.totalorder %s29, 1
      %p178 = por %p176, %p177
      %p180 = scmp.ne.s32.totalorder %s163, %s179
      %p181 = scmp.eq.s32.totalorder %s29, 0
      %p182 = por %p180, %p181
      %s183 = ssub.s32 %s30, %s42
      %s184 = ssub.s32 %s31, %s38
      %s185 = sor.u32 %s183, %s184
      %p186 = scmp.eq.s32.totalorder %s185, 0
      %s188 = sadd.s32 %s187, 1
      %s189 = scalar_select %p186, %s187, %s188
      %p192 = pneg %p186
      %p193 = scmp.eq.s32.totalorder %s23, 1
      %p194 = por %p192, %p193
      %p195 = scmp.ne.s32.totalorder %s187, %s190
      %p196 = scmp.eq.s32.totalorder %s23, 0
      %p197 = por %p195, %p196
      %p198 = scmp.ne.s32.totalorder %s187, %s190
      %p199 = scmp.eq.s32.totalorder %s28, 1
      %p200 = por %p198, %p199
      %p201 = scmp.ne.s32.totalorder %s190, %s191
      %p202 = scmp.eq.s32.totalorder %s28, 0
      %p203 = por %p201, %p202
      %p204 = scmp.ne.s32.totalorder %s190, %s191
      %p205 = scmp.eq.s32.totalorder %s29, 1
      %p206 = por %p204, %p205
      %p208 = scmp.ne.s32.totalorder %s191, %s207
      %p209 = scmp.eq.s32.totalorder %s29, 0
      %p210 = por %p208, %p209
      %p211 = scmp.le.s32.totalorder 1, %s23
      %p212 = scmp.lt.s32.totalorder %s23, 3
      %p213 = pnand %p211, %p212
      %p214 = pneg %p213
      // Predicated region
      $region9: #{tpu_custom_call.1} parent=5 // pred_check
        _
      $region10: #{tpu_custom_call.1} parent=5 // pred_check_branch
        %216 = sbr.rel (%p213) target = $region12
      $region11: #{tpu_custom_call.1} parent=5 // pred_region
        %s217 = ssub.s32 %s23, 1
        // Predicated region
        $region13: #{tpu_custom_call.1} parent=11 // pred_check
          %p218 = pneg %p84
        $region14: #{tpu_custom_call.1} parent=11 // pred_check_branch
          %220 = sbr.rel (%p218) target = $region16
        $region15: #{tpu_custom_call.1} parent=11 // pred_region
          %s222 = ssub.s32 1024, 1024
          %223 = vsyncadd [#allocation6], %s222
          %s224 = sshll.u32 [#allocation5], 4
          %s225 = int_to_ptr.vmem [resolvable:$true] %s224
          %230 = dma.hbm_to_vmem [thread:$0]  %s1, 1024, %s225, [#allocation6], 64, 64, 4
        $region16: #{tpu_custom_call.1} parent=11 // pred_fallthru
          _
        // Predicated region
        $region17: #{tpu_custom_call.1} parent=11 // pred_check
          %p231 = pneg %p105
        $region18: #{tpu_custom_call.1} parent=11 // pred_check_branch
          %233 = sbr.rel (%p231) target = $region20
        $region19: #{tpu_custom_call.1} parent=11 // pred_region
          _
        $region20: #{tpu_custom_call.1} parent=11 // pred_fallthru
          _
        // Predicated region
        $region21: #{tpu_custom_call.1} parent=11 // pred_check
          %p234 = pneg %p126
        $region22: #{tpu_custom_call.1} parent=11 // pred_check_branch
          %236 = sbr.rel (%p234) target = $region24
        $region23: #{tpu_custom_call.1} parent=11 // pred_region
          %s238 = ssub.s32 1024, 1024
          %239 = vsyncadd [#allocation6], %s238
          %s240 = sshll.u32 [#allocation7], 4
          %s241 = int_to_ptr.vmem [resolvable:$true] %s240
          %246 = dma.hbm_to_vmem [thread:$0]  %s3, 1024, %s241, [#allocation6], 64, 64, 4
        $region24: #{tpu_custom_call.1} parent=11 // pred_fallthru
          _
        // Predicated region
        $region25: #{tpu_custom_call.1} parent=11 // pred_check
          %p247 = pneg %p147
        $region26: #{tpu_custom_call.1} parent=11 // pred_check_branch
          %249 = sbr.rel (%p247) target = $region28
        $region27: #{tpu_custom_call.1} parent=11 // pred_region
          _
        $region28: #{tpu_custom_call.1} parent=11 // pred_fallthru
          _
      $region12: #{tpu_custom_call.1} parent=5 // pred_fallthru
        _
      %p250 = scmp.lt.s32.totalorder %s23, 2
      // Predicated region
      $region29: #{tpu_custom_call.1} parent=5 // pred_check
        %p251 = pneg %p250
      $region30: #{tpu_custom_call.1} parent=5 // pred_check_branch
        %253 = sbr.rel (%p251) target = $region32
      $region31: #{tpu_custom_call.1} parent=5 // pred_region
        // Predicated region
        $region33: #{tpu_custom_call.1} parent=31 // pred_check
          %p254 = pneg %p57
        $region34: #{tpu_custom_call.1} parent=31 // pred_check_branch
          %256 = sbr.rel (%p254) target = $region36
        $region35: #{tpu_custom_call.1} parent=31 // pred_region
          %s257 = sand.u32 %s47, 1
          %s258 = scalar_lea.sflag [#allocation3], %s257
          %s259 = sand.u32 %s47, 1
          %s260 = smul.addr %s259, 128
          %s261 = scalar_lea.vmem [#allocation2], %s260
          %s262 = smul.u32 32, %s31
          %s264 = ssub.s32 2048, 2048
          %265 = vsyncadd %s258, %s264
          %s266 = smul.addr %s30, 32
          %s267 = sadd.s32 %s262, %s266
          %s268 = smul.addr %s267, 64
          %s269 = scalar_lea.hbm %s0, %s268
          %s270 = sshll.u32 %s261, 4
          %s271 = int_to_ptr.vmem [resolvable:$true] %s270
          %276 = dma.hbm_to_vmem [thread:$0]  %s269, 2048, %s271, %s258, 64, 64, 4
        $region36: #{tpu_custom_call.1} parent=31 // pred_fallthru
          _
      $region32: #{tpu_custom_call.1} parent=5 // pred_fallthru
        _
      %p277 = scmp.le.s32.totalorder 1, %s23
      %p278 = scmp.lt.s32.totalorder %s23, 3
      %p279 = pnand %p277, %p278
      %p280 = pneg %p279
      // Predicated region
      $region37: #{tpu_custom_call.1} parent=5 // pred_check
        _
      $region38: #{tpu_custom_call.1} parent=5 // pred_check_branch
        %282 = sbr.rel (%p279) target = $region40
      $region39: #{tpu_custom_call.1} parent=5 // pred_region
        %s283 = ssub.s32 %s23, 1
        %s284 = sand.u32 %s50, 1
        %s285 = scalar_lea.sflag [#allocation3], %s284
        %s286 = sand.u32 %s50, 1
        %s287 = smul.addr %s286, 128
        %s288 = scalar_lea.vmem [#allocation2], %s287
        // Predicated region
        $region41: #{tpu_custom_call.1} parent=39 // pred_check
          %p289 = pneg %p63
        $region42: #{tpu_custom_call.1} parent=39 // pred_check_branch
          %291 = sbr.rel (%p289) target = $region44
        $region43: #{tpu_custom_call.1} parent=39 // pred_region
          %292 = dma.done %s285, 2048
        $region44: #{tpu_custom_call.1} parent=39 // pred_fallthru
          _
        // Predicated region
        $region45: #{tpu_custom_call.1} parent=39 // pred_check
          %p293 = pneg %p84
        $region46: #{tpu_custom_call.1} parent=39 // pred_check_branch
          %295 = sbr.rel (%p293) target = $region48
        $region47: #{tpu_custom_call.1} parent=39 // pred_region
          %296 = dma.done [#allocation6], 1024
        $region48: #{tpu_custom_call.1} parent=39 // pred_fallthru
          _
        // Predicated region
        $region49: #{tpu_custom_call.1} parent=39 // pred_check
          %p297 = pneg %p126
        $region50: #{tpu_custom_call.1} parent=39 // pred_check_branch
          %299 = sbr.rel (%p297) target = $region52
        $region51: #{tpu_custom_call.1} parent=39 // pred_region
          %300 = dma.done [#allocation6], 1024
        $region52: #{tpu_custom_call.1} parent=39 // pred_fallthru
          _
        %s301 = sand.u32 %s50, 1
        %s302 = scalar_lea.sflag [#allocation3], %s301
        %s303 = sand.u32 %s50, 1
        %s304 = smul.addr %s303, 128
        %s305 = scalar_lea.vmem [#allocation2], %s304
        %p306 = pneg %p63
        %p307 = pneg %p60
        %p308 = pneg %p84
        %p309 = pneg %p81
        %p310 = pneg %p105
        %p311 = pneg %p102
        %p312 = pneg %p126
        %p313 = pneg %p123
        %p314 = pneg %p147
        %p315 = pneg %p144
        %p316 = pneg %p175
        %p317 = pneg %p172
        %s318 = sand.u32 %s162, 1
        %s319 = scalar_lea.sflag [#allocation4], %s318
        %s320 = sand.u32 %s162, 1
        %s321 = smul.addr %s320, 128
        %s322 = scalar_lea.vmem [#allocation8], %s321
        %p323 = pneg %p203
        %p324 = pneg %p200
        %s325 = sand.u32 %s190, 1
        %s326 = scalar_lea.sflag [#allocation10], %s325
        %s327 = sand.u32 %s190, 1
        %s328 = smul.addr %s327, 128
        %s329 = scalar_lea.vmem [#allocation9], %s328
        %s330 = smul.u32 32, %s33
        %s331 = smul.u32 32, %s33
        %s332 = smul.u32 32, %s33
        %v334 = vld [vmem:[%s288] sm:$0xf]
        %v335 = vld [vmem:[%s288 + $0x4] sm:$0xf]
        %v336 = vld [vmem:[%s288 + $0x8] sm:$0xf]
        %v337 = vld [vmem:[%s288 + $0xc] sm:$0xf]
        %v338 = vld [vmem:[%s288 + $0x10] sm:$0xf]
        %v339 = vld [vmem:[%s288 + $0x14] sm:$0xf]
        %v340 = vld [vmem:[%s288 + $0x18] sm:$0xf]
        %v341 = vld [vmem:[%s288 + $0x1c] sm:$0xf]
        %v342 = vld [vmem:[%s288 + $0x20] sm:$0xf]
        %v343 = vld [vmem:[%s288 + $0x24] sm:$0xf]
        %v344 = vld [vmem:[%s288 + $0x28] sm:$0xf]
        %v345 = vld [vmem:[%s288 + $0x2c] sm:$0xf]
        %v346 = vld [vmem:[%s288 + $0x30] sm:$0xf]
        %v347 = vld [vmem:[%s288 + $0x34] sm:$0xf]
        %v348 = vld [vmem:[%s288 + $0x38] sm:$0xf]
        %v349 = vld [vmem:[%s288 + $0x3c] sm:$0xf]
        %v350 = vld [vmem:[%s288 + $0x40] sm:$0xf]
        %v351 = vld [vmem:[%s288 + $0x44] sm:$0xf]
        %v352 = vld [vmem:[%s288 + $0x48] sm:$0xf]
        %v353 = vld [vmem:[%s288 + $0x4c] sm:$0xf]
        %v354 = vld [vmem:[%s288 + $0x50] sm:$0xf]
        %v355 = vld [vmem:[%s288 + $0x54] sm:$0xf]
        %v356 = vld [vmem:[%s288 + $0x58] sm:$0xf]
        %v357 = vld [vmem:[%s288 + $0x5c] sm:$0xf]
        %v358 = vld [vmem:[%s288 + $0x60] sm:$0xf]
        %v359 = vld [vmem:[%s288 + $0x64] sm:$0xf]
        %v360 = vld [vmem:[%s288 + $0x68] sm:$0xf]
        %v361 = vld [vmem:[%s288 + $0x6c] sm:$0xf]
        %v362 = vld [vmem:[%s288 + $0x70] sm:$0xf]
        %v363 = vld [vmem:[%s288 + $0x74] sm:$0xf]
        %v364 = vld [vmem:[%s288 + $0x78] sm:$0xf]
        %v365 = vld [vmem:[%s288 + $0x7c] sm:$0xf]
        %v366 = vld [vmem:[#allocation5] sm:$0xf]
        %v367 = vld [vmem:[#allocation5 + $0x4] sm:$0xf]
        %v368 = vld [vmem:[#allocation5 + $0x8] sm:$0xf]
        %v369 = vld [vmem:[#allocation5 + $0xc] sm:$0xf]
        %v370 = vld [vmem:[#allocation5 + $0x10] sm:$0xf]
        %v371 = vld [vmem:[#allocation5 + $0x14] sm:$0xf]
        %v372 = vld [vmem:[#allocation5 + $0x18] sm:$0xf]
        %v373 = vld [vmem:[#allocation5 + $0x1c] sm:$0xf]
        %v374 = vld [vmem:[#allocation5 + $0x20] sm:$0xf]
        %v375 = vld [vmem:[#allocation5 + $0x24] sm:$0xf]
        %v376 = vld [vmem:[#allocation5 + $0x28] sm:$0xf]
        %v377 = vld [vmem:[#allocation5 + $0x2c] sm:$0xf]
        %v378 = vld [vmem:[#allocation5 + $0x30] sm:$0xf]
        %v379 = vld [vmem:[#allocation5 + $0x34] sm:$0xf]
        %v380 = vld [vmem:[#allocation5 + $0x38] sm:$0xf]
        %v381 = vld [vmem:[#allocation5 + $0x3c] sm:$0xf]
        %v382 = vld [vmem:[%s2] sm:$0x1]
        %v384 = vlaneseq
        %v385 = vshrl.u32 %v384, 7
        %v386 = vsub.s32 0, %v385
        %v387 = vrot.slane %v382, %v386
        %v421 = vunpack.c.l.b16 %v334
        %v422 = vunpack.c.l.b16 %v335
        %v423 = vunpack.c.l.b16 %v336
        %v424 = vunpack.c.l.b16 %v337
        %v425 = vunpack.c.l.b16 %v338
        %v426 = vunpack.c.l.b16 %v339
        %v427 = vunpack.c.l.b16 %v340
        %v428 = vunpack.c.l.b16 %v341
        %v429 = vunpack.c.l.b16 %v342
        %v430 = vunpack.c.l.b16 %v343
        %v431 = vunpack.c.l.b16 %v344
        %v432 = vunpack.c.l.b16 %v345
        %v433 = vunpack.c.l.b16 %v346
        %v434 = vunpack.c.l.b16 %v347
        %v435 = vunpack.c.l.b16 %v348
        %v436 = vunpack.c.l.b16 %v349
        %v437 = vunpack.c.l.b16 %v350
        %v438 = vunpack.c.l.b16 %v351
        %v439 = vunpack.c.l.b16 %v352
        %v440 = vunpack.c.l.b16 %v353
        %v441 = vunpack.c.l.b16 %v354
        %v442 = vunpack.c.l.b16 %v355
        %v443 = vunpack.c.l.b16 %v356
        %v444 = vunpack.c.l.b16 %v357
        %v445 = vunpack.c.l.b16 %v358
        %v446 = vunpack.c.l.b16 %v359
        %v447 = vunpack.c.l.b16 %v360
        %v448 = vunpack.c.l.b16 %v361
        %v449 = vunpack.c.l.b16 %v362
        %v450 = vunpack.c.l.b16 %v363
        %v451 = vunpack.c.l.b16 %v364
        %v452 = vunpack.c.l.b16 %v365
        %v453 = vpack.c.b16 %v422, %v421
        %v454 = vpack.c.b16 %v424, %v423
        %v455 = vpack.c.b16 %v426, %v425
        %v456 = vpack.c.b16 %v428, %v427
        %v457 = vpack.c.b16 %v430, %v429
        %v458 = vpack.c.b16 %v432, %v431
        %v459 = vpack.c.b16 %v434, %v433
        %v460 = vpack.c.b16 %v436, %v435
        %v461 = vpack.c.b16 %v438, %v437
        %v462 = vpack.c.b16 %v440, %v439
        %v463 = vpack.c.b16 %v442, %v441
        %v464 = vpack.c.b16 %v444, %v443
        %v465 = vpack.c.b16 %v446, %v445
        %v466 = vpack.c.b16 %v448, %v447
        %v467 = vpack.c.b16 %v450, %v449
        %v468 = vpack.c.b16 %v452, %v451
        %v501 = vunpack.c.l.b16 %v366
        %v502 = vunpack.c.l.b16 %v367
        %v503 = vunpack.c.l.b16 %v368
        %v504 = vunpack.c.l.b16 %v369
        %v505 = vunpack.c.l.b16 %v370
        %v506 = vunpack.c.l.b16 %v371
        %v507 = vunpack.c.l.b16 %v372
        %v508 = vunpack.c.l.b16 %v373
        %v509 = vunpack.c.l.b16 %v374
        %v510 = vunpack.c.l.b16 %v375
        %v511 = vunpack.c.l.b16 %v376
        %v512 = vunpack.c.l.b16 %v377
        %v513 = vunpack.c.l.b16 %v378
        %v514 = vunpack.c.l.b16 %v379
        %v515 = vunpack.c.l.b16 %v380
        %v516 = vunpack.c.l.b16 %v381
        %v517 = vpack.c.b16 %v502, %v501
        %v518 = vpack.c.b16 %v504, %v503
        %v519 = vpack.c.b16 %v506, %v505
        %v520 = vpack.c.b16 %v508, %v507
        %v521 = vpack.c.b16 %v510, %v509
        %v522 = vpack.c.b16 %v512, %v511
        %v523 = vpack.c.b16 %v514, %v513
        %v524 = vpack.c.b16 %v516, %v515
        %533 = vmatprep.subr.bf16.mxu0 0
        %534 = vmatpush1.bf16.msra.mxu0 %v524
        %535 = vmatprep.subr.bf16.mxu0 0
        %536 = vmatpush1.bf16.msra.mxu0 %v523
        %537 = vmatprep.subr.bf16.mxu0 0
        %538 = vmatpush1.bf16.msra.mxu0 %v522
        %539 = vmatprep.subr.bf16.mxu0 0
        %540 = vmatpush1.bf16.msra.mxu0 %v521
        %541 = vmatprep.subr.bf16.mxu0 0
        %542 = vmatpush1.bf16.msra.mxu0 %v520
        %543 = vmatprep.subr.bf16.mxu0 0
        %544 = vmatpush1.bf16.msra.mxu0 %v519
        %545 = vmatprep.subr.bf16.mxu0 0
        %546 = vmatpush1.bf16.msra.mxu0 %v518
        %547 = vmatprep.subr.bf16.mxu0 0
        %548 = vmatpush1.bf16.msra.mxu0 %v517
        %549 = vmatprep.subr.bf16.mxu0 0
        %550 = vmatpush2.bf16.msra.mxu0 0
        %551 = vmatprep.subr.bf16.mxu0 0
        %552 = vmatpush2.bf16.msra.mxu0 0
        %553 = vmatprep.subr.bf16.mxu0 0
        %554 = vmatpush2.bf16.msra.mxu0 0
        %555 = vmatprep.subr.bf16.mxu0 0
        %556 = vmatpush2.bf16.msra.mxu0 0
        %557 = vmatprep.subr.bf16.mxu0 0
        %558 = vmatpush2.bf16.msra.mxu0 0
        %559 = vmatprep.subr.bf16.mxu0 0
        %560 = vmatpush2.bf16.msra.mxu0 0
        %561 = vmatprep.subr.bf16.mxu0 0
        %562 = vmatpush2.bf16.msra.mxu0 0
        %563 = vmatprep.subr.bf16.mxu0 0
        %564 = vmatpush2.bf16.msra.mxu0 0
        %565 = vmatprep.mubr.bf16.mxu0 0
        %566 = vmatmul.mubr.bf16.gmra.mxu0 %v453
        %v567 = vpop.f32.mrf.mxu0
        %v568 = vadd.f32 %v387, %v567
        %v569 = vpop.f32.mrf.mxu0
        %v570 = vpop.f32.mrf.mxu0
        %v571 = vadd.f32 %v387, %v570
        %v572 = vpop.f32.mrf.mxu0
        %573 = vmatprep.mubr.bf16.mxu0 0
        %574 = vmatmul.mubr.bf16.gmra.mxu0 %v454
        %v575 = vpop.f32.mrf.mxu0
        %v576 = vadd.f32 %v387, %v575
        %v577 = vpop.f32.mrf.mxu0
        %v578 = vpop.f32.mrf.mxu0
        %v579 = vadd.f32 %v387, %v578
        %v580 = vpop.f32.mrf.mxu0
        %581 = vmatprep.mubr.bf16.mxu0 0
        %582 = vmatmul.mubr.bf16.gmra.mxu0 %v455
        %v583 = vpop.f32.mrf.mxu0
        %v584 = vadd.f32 %v387, %v583
        %v585 = vpop.f32.mrf.mxu0
        %v586 = vpop.f32.mrf.mxu0
        %v587 = vadd.f32 %v387, %v586
        %v588 = vpop.f32.mrf.mxu0
        %589 = vmatprep.mubr.bf16.mxu0 0
        %590 = vmatmul.mubr.bf16.gmra.mxu0 %v456
        %v591 = vpop.f32.mrf.mxu0
        %v592 = vadd.f32 %v387, %v591
        %v593 = vpop.f32.mrf.mxu0
        %v594 = vpop.f32.mrf.mxu0
        %v595 = vadd.f32 %v387, %v594
        %v596 = vpop.f32.mrf.mxu0
        %597 = vmatprep.mubr.bf16.mxu0 0
        %598 = vmatmul.mubr.bf16.gmra.mxu0 %v457
        %v599 = vpop.f32.mrf.mxu0
        %v600 = vadd.f32 %v387, %v599
        %v601 = vpop.f32.mrf.mxu0
        %v602 = vpop.f32.mrf.mxu0
        %v603 = vadd.f32 %v387, %v602
        %v604 = vpop.f32.mrf.mxu0
        %605 = vmatprep.mubr.bf16.mxu0 0
        %606 = vmatmul.mubr.bf16.gmra.mxu0 %v458
        %v607 = vpop.f32.mrf.mxu0
        %v608 = vadd.f32 %v387, %v607
        %v609 = vpop.f32.mrf.mxu0
        %v610 = vpop.f32.mrf.mxu0
        %v611 = vadd.f32 %v387, %v610
        %v612 = vpop.f32.mrf.mxu0
        %613 = vmatprep.mubr.bf16.mxu0 0
        %614 = vmatmul.mubr.bf16.gmra.mxu0 %v459
        %v615 = vpop.f32.mrf.mxu0
        %v616 = vadd.f32 %v387, %v615
        %v617 = vpop.f32.mrf.mxu0
        %v618 = vpop.f32.mrf.mxu0
        %v619 = vadd.f32 %v387, %v618
        %v620 = vpop.f32.mrf.mxu0
        %621 = vmatprep.mubr.bf16.mxu0 0
        %622 = vmatmul.mubr.bf16.gmra.mxu0 %v460
        %v623 = vpop.f32.mrf.mxu0
        %v624 = vadd.f32 %v387, %v623
        %v625 = vpop.f32.mrf.mxu0
        %v626 = vpop.f32.mrf.mxu0
        %v627 = vadd.f32 %v387, %v626
        %v628 = vpop.f32.mrf.mxu0
        %629 = vmatprep.mubr.bf16.mxu0 0
        %630 = vmatmul.mubr.bf16.gmra.mxu0 %v461
        %v631 = vpop.f32.mrf.mxu0
        %v632 = vadd.f32 %v387, %v631
        %v633 = vpop.f32.mrf.mxu0
        %v634 = vpop.f32.mrf.mxu0
        %v635 = vadd.f32 %v387, %v634
        %v636 = vpop.f32.mrf.mxu0
        %637 = vmatprep.mubr.bf16.mxu0 0
        %638 = vmatmul.mubr.bf16.gmra.mxu0 %v462
        %v639 = vpop.f32.mrf.mxu0
        %v640 = vadd.f32 %v387, %v639
        %v641 = vpop.f32.mrf.mxu0
        %v642 = vpop.f32.mrf.mxu0
        %v643 = vadd.f32 %v387, %v642
        %v644 = vpop.f32.mrf.mxu0
        %645 = vmatprep.mubr.bf16.mxu0 0
        %646 = vmatmul.mubr.bf16.gmra.mxu0 %v463
        %v647 = vpop.f32.mrf.mxu0
        %v648 = vadd.f32 %v387, %v647
        %v649 = vpop.f32.mrf.mxu0
        %v650 = vpop.f32.mrf.mxu0
        %v651 = vadd.f32 %v387, %v650
        %v652 = vpop.f32.mrf.mxu0
        %653 = vmatprep.mubr.bf16.mxu0 0
        %654 = vmatmul.mubr.bf16.gmra.mxu0 %v464
        %v655 = vpop.f32.mrf.mxu0
        %v656 = vadd.f32 %v387, %v655
        %v657 = vpop.f32.mrf.mxu0
        %v658 = vpop.f32.mrf.mxu0
        %v659 = vadd.f32 %v387, %v658
        %v660 = vpop.f32.mrf.mxu0
        %661 = vmatprep.mubr.bf16.mxu0 0
        %662 = vmatmul.mubr.bf16.gmra.mxu0 %v465
        %v663 = vpop.f32.mrf.mxu0
        %v664 = vadd.f32 %v387, %v663
        %v665 = vpop.f32.mrf.mxu0
        %v666 = vpop.f32.mrf.mxu0
        %v667 = vadd.f32 %v387, %v666
        %v668 = vpop.f32.mrf.mxu0
        %669 = vmatprep.mubr.bf16.mxu0 0
        %670 = vmatmul.mubr.bf16.gmra.mxu0 %v466
        %v671 = vpop.f32.mrf.mxu0
        %v672 = vadd.f32 %v387, %v671
        %v673 = vpop.f32.mrf.mxu0
        %v674 = vpop.f32.mrf.mxu0
        %v675 = vadd.f32 %v387, %v674
        %v676 = vpop.f32.mrf.mxu0
        %677 = vmatprep.mubr.bf16.mxu0 0
        %678 = vmatmul.mubr.bf16.gmra.mxu0 %v467
        %v679 = vpop.f32.mrf.mxu0
        %v680 = vadd.f32 %v387, %v679
        %v681 = vpop.f32.mrf.mxu0
        %v682 = vpop.f32.mrf.mxu0
        %v683 = vadd.f32 %v387, %v682
        %v684 = vpop.f32.mrf.mxu0
        %685 = vmatprep.mubr.bf16.mxu0 0
        %686 = vmatmul.mubr.bf16.gmra.mxu0 %v468
        %v687 = vpop.f32.mrf.mxu0
        %v688 = vadd.f32 %v387, %v687
        %v689 = vpop.f32.mrf.mxu0
        %v690 = vpop.f32.mrf.mxu0
        %v691 = vadd.f32 %v387, %v690
        %v692 = vpop.f32.mrf.mxu0
        %693 = vdwg.mxu0
        %v694 = vpack.c.bf16 %v571, %v568
        %v695 = vpack.c.bf16 %v579, %v576
        %v696 = vpack.c.bf16 %v587, %v584
        %v697 = vpack.c.bf16 %v595, %v592
        %v698 = vpack.c.bf16 %v603, %v600
        %v699 = vpack.c.bf16 %v611, %v608
        %v700 = vpack.c.bf16 %v619, %v616
        %v701 = vpack.c.bf16 %v627, %v624
        %v702 = vpack.c.bf16 %v635, %v632
        %v703 = vpack.c.bf16 %v643, %v640
        %v704 = vpack.c.bf16 %v651, %v648
        %v705 = vpack.c.bf16 %v659, %v656
        %v706 = vpack.c.bf16 %v667, %v664
        %v707 = vpack.c.bf16 %v675, %v672
        %v708 = vpack.c.bf16 %v683, %v680
        %v709 = vpack.c.bf16 %v691, %v688
        %v726 = vunpack.c.l.b16 %v694
        %v727 = vunpack.c.h.b16 %v694
        %v728 = vunpack.c.l.b16 %v695
        %v729 = vunpack.c.h.b16 %v695
        %v730 = vunpack.c.l.b16 %v696
        %v731 = vunpack.c.h.b16 %v696
        %v732 = vunpack.c.l.b16 %v697
        %v733 = vunpack.c.h.b16 %v697
        %v734 = vunpack.c.l.b16 %v698
        %v735 = vunpack.c.h.b16 %v698
        %v736 = vunpack.c.l.b16 %v699
        %v737 = vunpack.c.h.b16 %v699
        %v738 = vunpack.c.l.b16 %v700
        %v739 = vunpack.c.h.b16 %v700
        %v740 = vunpack.c.l.b16 %v701
        %v741 = vunpack.c.h.b16 %v701
        %v742 = vunpack.c.l.b16 %v702
        %v743 = vunpack.c.h.b16 %v702
        %v744 = vunpack.c.l.b16 %v703
        %v745 = vunpack.c.h.b16 %v703
        %v746 = vunpack.c.l.b16 %v704
        %v747 = vunpack.c.h.b16 %v704
        %v748 = vunpack.c.l.b16 %v705
        %v749 = vunpack.c.h.b16 %v705
        %v750 = vunpack.c.l.b16 %v706
        %v751 = vunpack.c.h.b16 %v706
        %v752 = vunpack.c.l.b16 %v707
        %v753 = vunpack.c.h.b16 %v707
        %v754 = vunpack.c.l.b16 %v708
        %v755 = vunpack.c.h.b16 %v708
        %v756 = vunpack.c.l.b16 %v709
        %v757 = vunpack.c.h.b16 %v709
        %v758 = vpack.c.b16 %v726, %v726
        %v759 = vpack.c.b16 %v727, %v727
        %v760 = vpack.c.b16 %v728, %v728
        %v761 = vpack.c.b16 %v729, %v729
        %v762 = vpack.c.b16 %v730, %v730
        %v763 = vpack.c.b16 %v731, %v731
        %v764 = vpack.c.b16 %v732, %v732
        %v765 = vpack.c.b16 %v733, %v733
        %v766 = vpack.c.b16 %v734, %v734
        %v767 = vpack.c.b16 %v735, %v735
        %v768 = vpack.c.b16 %v736, %v736
        %v769 = vpack.c.b16 %v737, %v737
        %v770 = vpack.c.b16 %v738, %v738
        %v771 = vpack.c.b16 %v739, %v739
        %v772 = vpack.c.b16 %v740, %v740
        %v773 = vpack.c.b16 %v741, %v741
        %v774 = vpack.c.b16 %v742, %v742
        %v775 = vpack.c.b16 %v743, %v743
        %v776 = vpack.c.b16 %v744, %v744
        %v777 = vpack.c.b16 %v745, %v745
        %v778 = vpack.c.b16 %v746, %v746
        %v779 = vpack.c.b16 %v747, %v747
        %v780 = vpack.c.b16 %v748, %v748
        %v781 = vpack.c.b16 %v749, %v749
        %v782 = vpack.c.b16 %v750, %v750
        %v783 = vpack.c.b16 %v751, %v751
        %v784 = vpack.c.b16 %v752, %v752
        %v785 = vpack.c.b16 %v753, %v753
        %v786 = vpack.c.b16 %v754, %v754
        %v787 = vpack.c.b16 %v755, %v755
        %v788 = vpack.c.b16 %v756, %v756
        %v789 = vpack.c.b16 %v757, %v757
        %822 = vst [vmem:[%s322] sm:$0xf] %v758
        %823 = vst [vmem:[%s322 + $0x4] sm:$0xf] %v759
        %824 = vst [vmem:[%s322 + $0x8] sm:$0xf] %v760
        %825 = vst [vmem:[%s322 + $0xc] sm:$0xf] %v761
        %826 = vst [vmem:[%s322 + $0x10] sm:$0xf] %v762
        %827 = vst [vmem:[%s322 + $0x14] sm:$0xf] %v763
        %828 = vst [vmem:[%s322 + $0x18] sm:$0xf] %v764
        %829 = vst [vmem:[%s322 + $0x1c] sm:$0xf] %v765
        %830 = vst [vmem:[%s322 + $0x20] sm:$0xf] %v766
        %831 = vst [vmem:[%s322 + $0x24] sm:$0xf] %v767
        %832 = vst [vmem:[%s322 + $0x28] sm:$0xf] %v768
        %833 = vst [vmem:[%s322 + $0x2c] sm:$0xf] %v769
        %834 = vst [vmem:[%s322 + $0x30] sm:$0xf] %v770
        %835 = vst [vmem:[%s322 + $0x34] sm:$0xf] %v771
        %836 = vst [vmem:[%s322 + $0x38] sm:$0xf] %v772
        %837 = vst [vmem:[%s322 + $0x3c] sm:$0xf] %v773
        %838 = vst [vmem:[%s322 + $0x40] sm:$0xf] %v774
        %839 = vst [vmem:[%s322 + $0x44] sm:$0xf] %v775
        %840 = vst [vmem:[%s322 + $0x48] sm:$0xf] %v776
        %841 = vst [vmem:[%s322 + $0x4c] sm:$0xf] %v777
        %842 = vst [vmem:[%s322 + $0x50] sm:$0xf] %v778
        %843 = vst [vmem:[%s322 + $0x54] sm:$0xf] %v779
        %844 = vst [vmem:[%s322 + $0x58] sm:$0xf] %v780
        %845 = vst [vmem:[%s322 + $0x5c] sm:$0xf] %v781
        %846 = vst [vmem:[%s322 + $0x60] sm:$0xf] %v782
        %847 = vst [vmem:[%s322 + $0x64] sm:$0xf] %v783
        %848 = vst [vmem:[%s322 + $0x68] sm:$0xf] %v784
        %849 = vst [vmem:[%s322 + $0x6c] sm:$0xf] %v785
        %850 = vst [vmem:[%s322 + $0x70] sm:$0xf] %v786
        %851 = vst [vmem:[%s322 + $0x74] sm:$0xf] %v787
        %852 = vst [vmem:[%s322 + $0x78] sm:$0xf] %v788
        %853 = vst [vmem:[%s322 + $0x7c] sm:$0xf] %v789
        %v854 = vld [vmem:[#allocation7] sm:$0xf]
        %v855 = vld [vmem:[#allocation7 + $0x4] sm:$0xf]
        %v856 = vld [vmem:[#allocation7 + $0x8] sm:$0xf]
        %v857 = vld [vmem:[#allocation7 + $0xc] sm:$0xf]
        %v858 = vld [vmem:[#allocation7 + $0x10] sm:$0xf]
        %v859 = vld [vmem:[#allocation7 + $0x14] sm:$0xf]
        %v860 = vld [vmem:[#allocation7 + $0x18] sm:$0xf]
        %v861 = vld [vmem:[#allocation7 + $0x1c] sm:$0xf]
        %v862 = vld [vmem:[#allocation7 + $0x20] sm:$0xf]
        %v863 = vld [vmem:[#allocation7 + $0x24] sm:$0xf]
        %v864 = vld [vmem:[#allocation7 + $0x28] sm:$0xf]
        %v865 = vld [vmem:[#allocation7 + $0x2c] sm:$0xf]
        %v866 = vld [vmem:[#allocation7 + $0x30] sm:$0xf]
        %v867 = vld [vmem:[#allocation7 + $0x34] sm:$0xf]
        %v868 = vld [vmem:[#allocation7 + $0x38] sm:$0xf]
        %v869 = vld [vmem:[#allocation7 + $0x3c] sm:$0xf]
        %v870 = vld [vmem:[%s4] sm:$0x1]
        %v872 = vlaneseq
        %v873 = vshrl.u32 %v872, 7
        %v874 = vsub.s32 0, %v873
        %v875 = vrot.slane %v870, %v874
        %v893 = vunpack.c.l.b16 %v854
        %v894 = vunpack.c.l.b16 %v855
        %v895 = vunpack.c.l.b16 %v856
        %v896 = vunpack.c.l.b16 %v857
        %v897 = vunpack.c.l.b16 %v858
        %v898 = vunpack.c.l.b16 %v859
        %v899 = vunpack.c.l.b16 %v860
        %v900 = vunpack.c.l.b16 %v861
        %v901 = vunpack.c.l.b16 %v862
        %v902 = vunpack.c.l.b16 %v863
        %v903 = vunpack.c.l.b16 %v864
        %v904 = vunpack.c.l.b16 %v865
        %v905 = vunpack.c.l.b16 %v866
        %v906 = vunpack.c.l.b16 %v867
        %v907 = vunpack.c.l.b16 %v868
        %v908 = vunpack.c.l.b16 %v869
        %v909 = vpack.c.b16 %v894, %v893
        %v910 = vpack.c.b16 %v896, %v895
        %v911 = vpack.c.b16 %v898, %v897
        %v912 = vpack.c.b16 %v900, %v899
        %v913 = vpack.c.b16 %v902, %v901
        %v914 = vpack.c.b16 %v904, %v903
        %v915 = vpack.c.b16 %v906, %v905
        %v916 = vpack.c.b16 %v908, %v907
        %925 = vmatprep.subr.bf16.mxu0 0
        %926 = vmatpush1.bf16.msra.mxu0 %v916
        %927 = vmatprep.subr.bf16.mxu0 0
        %928 = vmatpush1.bf16.msra.mxu0 %v915
        %929 = vmatprep.subr.bf16.mxu0 0
        %930 = vmatpush1.bf16.msra.mxu0 %v914
        %931 = vmatprep.subr.bf16.mxu0 0
        %932 = vmatpush1.bf16.msra.mxu0 %v913
        %933 = vmatprep.subr.bf16.mxu0 0
        %934 = vmatpush1.bf16.msra.mxu0 %v912
        %935 = vmatprep.subr.bf16.mxu0 0
        %936 = vmatpush1.bf16.msra.mxu0 %v911
        %937 = vmatprep.subr.bf16.mxu0 0
        %938 = vmatpush1.bf16.msra.mxu0 %v910
        %939 = vmatprep.subr.bf16.mxu0 0
        %940 = vmatpush1.bf16.msra.mxu0 %v909
        %941 = vmatprep.subr.bf16.mxu0 0
        %942 = vmatpush2.bf16.msra.mxu0 0
        %943 = vmatprep.subr.bf16.mxu0 0
        %944 = vmatpush2.bf16.msra.mxu0 0
        %945 = vmatprep.subr.bf16.mxu0 0
        %946 = vmatpush2.bf16.msra.mxu0 0
        %947 = vmatprep.subr.bf16.mxu0 0
        %948 = vmatpush2.bf16.msra.mxu0 0
        %949 = vmatprep.subr.bf16.mxu0 0
        %950 = vmatpush2.bf16.msra.mxu0 0
        %951 = vmatprep.subr.bf16.mxu0 0
        %952 = vmatpush2.bf16.msra.mxu0 0
        %953 = vmatprep.subr.bf16.mxu0 0
        %954 = vmatpush2.bf16.msra.mxu0 0
        %955 = vmatprep.subr.bf16.mxu0 0
        %956 = vmatpush2.bf16.msra.mxu0 0
        %957 = vmatprep.mubr.bf16.mxu0 0
        %958 = vmatmul.mubr.bf16.gmra.mxu0 %v453
        %v959 = vpop.f32.mrf.mxu0
        %v960 = vadd.f32 %v875, %v959
        %v961 = vpop.f32.mrf.mxu0
        %v962 = vpop.f32.mrf.mxu0
        %v963 = vadd.f32 %v875, %v962
        %v964 = vpop.f32.mrf.mxu0
        %965 = vmatprep.mubr.bf16.mxu0 0
        %966 = vmatmul.mubr.bf16.gmra.mxu0 %v454
        %v967 = vpop.f32.mrf.mxu0
        %v968 = vadd.f32 %v875, %v967
        %v969 = vpop.f32.mrf.mxu0
        %v970 = vpop.f32.mrf.mxu0
        %v971 = vadd.f32 %v875, %v970
        %v972 = vpop.f32.mrf.mxu0
        %973 = vmatprep.mubr.bf16.mxu0 0
        %974 = vmatmul.mubr.bf16.gmra.mxu0 %v455
        %v975 = vpop.f32.mrf.mxu0
        %v976 = vadd.f32 %v875, %v975
        %v977 = vpop.f32.mrf.mxu0
        %v978 = vpop.f32.mrf.mxu0
        %v979 = vadd.f32 %v875, %v978
        %v980 = vpop.f32.mrf.mxu0
        %981 = vmatprep.mubr.bf16.mxu0 0
        %982 = vmatmul.mubr.bf16.gmra.mxu0 %v456
        %v983 = vpop.f32.mrf.mxu0
        %v984 = vadd.f32 %v875, %v983
        %v985 = vpop.f32.mrf.mxu0
        %v986 = vpop.f32.mrf.mxu0
        %v987 = vadd.f32 %v875, %v986
        %v988 = vpop.f32.mrf.mxu0
        %989 = vmatprep.mubr.bf16.mxu0 0
        %990 = vmatmul.mubr.bf16.gmra.mxu0 %v457
        %v991 = vpop.f32.mrf.mxu0
        %v992 = vadd.f32 %v875, %v991
        %v993 = vpop.f32.mrf.mxu0
        %v994 = vpop.f32.mrf.mxu0
        %v995 = vadd.f32 %v875, %v994
        %v996 = vpop.f32.mrf.mxu0
        %997 = vmatprep.mubr.bf16.mxu0 0
        %998 = vmatmul.mubr.bf16.gmra.mxu0 %v458
        %v999 = vpop.f32.mrf.mxu0
        %v1000 = vadd.f32 %v875, %v999
        %v1001 = vpop.f32.mrf.mxu0
        %v1002 = vpop.f32.mrf.mxu0
        %v1003 = vadd.f32 %v875, %v1002
        %v1004 = vpop.f32.mrf.mxu0
        %1005 = vmatprep.mubr.bf16.mxu0 0
        %1006 = vmatmul.mubr.bf16.gmra.mxu0 %v459
        %v1007 = vpop.f32.mrf.mxu0
        %v1008 = vadd.f32 %v875, %v1007
        %v1009 = vpop.f32.mrf.mxu0
        %v1010 = vpop.f32.mrf.mxu0
        %v1011 = vadd.f32 %v875, %v1010
        %v1012 = vpop.f32.mrf.mxu0
        %1013 = vmatprep.mubr.bf16.mxu0 0
        %1014 = vmatmul.mubr.bf16.gmra.mxu0 %v460
        %v1015 = vpop.f32.mrf.mxu0
        %v1016 = vadd.f32 %v875, %v1015
        %v1017 = vpop.f32.mrf.mxu0
        %v1018 = vpop.f32.mrf.mxu0
        %v1019 = vadd.f32 %v875, %v1018
        %v1020 = vpop.f32.mrf.mxu0
        %1021 = vmatprep.mubr.bf16.mxu0 0
        %1022 = vmatmul.mubr.bf16.gmra.mxu0 %v461
        %v1023 = vpop.f32.mrf.mxu0
        %v1024 = vadd.f32 %v875, %v1023
        %v1025 = vpop.f32.mrf.mxu0
        %v1026 = vpop.f32.mrf.mxu0
        %v1027 = vadd.f32 %v875, %v1026
        %v1028 = vpop.f32.mrf.mxu0
        %1029 = vmatprep.mubr.bf16.mxu0 0
        %1030 = vmatmul.mubr.bf16.gmra.mxu0 %v462
        %v1031 = vpop.f32.mrf.mxu0
        %v1032 = vadd.f32 %v875, %v1031
        %v1033 = vpop.f32.mrf.mxu0
        %v1034 = vpop.f32.mrf.mxu0
        %v1035 = vadd.f32 %v875, %v1034
        %v1036 = vpop.f32.mrf.mxu0
        %1037 = vmatprep.mubr.bf16.mxu0 0
        %1038 = vmatmul.mubr.bf16.gmra.mxu0 %v463
        %v1039 = vpop.f32.mrf.mxu0
        %v1040 = vadd.f32 %v875, %v1039
        %v1041 = vpop.f32.mrf.mxu0
        %v1042 = vpop.f32.mrf.mxu0
        %v1043 = vadd.f32 %v875, %v1042
        %v1044 = vpop.f32.mrf.mxu0
        %1045 = vmatprep.mubr.bf16.mxu0 0
        %1046 = vmatmul.mubr.bf16.gmra.mxu0 %v464
        %v1047 = vpop.f32.mrf.mxu0
        %v1048 = vadd.f32 %v875, %v1047
        %v1049 = vpop.f32.mrf.mxu0
        %v1050 = vpop.f32.mrf.mxu0
        %v1051 = vadd.f32 %v875, %v1050
        %v1052 = vpop.f32.mrf.mxu0
        %1053 = vmatprep.mubr.bf16.mxu0 0
        %1054 = vmatmul.mubr.bf16.gmra.mxu0 %v465
        %v1055 = vpop.f32.mrf.mxu0
        %v1056 = vadd.f32 %v875, %v1055
        %v1057 = vpop.f32.mrf.mxu0
        %v1058 = vpop.f32.mrf.mxu0
        %v1059 = vadd.f32 %v875, %v1058
        %v1060 = vpop.f32.mrf.mxu0
        %1061 = vmatprep.mubr.bf16.mxu0 0
        %1062 = vmatmul.mubr.bf16.gmra.mxu0 %v466
        %v1063 = vpop.f32.mrf.mxu0
        %v1064 = vadd.f32 %v875, %v1063
        %v1065 = vpop.f32.mrf.mxu0
        %v1066 = vpop.f32.mrf.mxu0
        %v1067 = vadd.f32 %v875, %v1066
        %v1068 = vpop.f32.mrf.mxu0
        %1069 = vmatprep.mubr.bf16.mxu0 0
        %1070 = vmatmul.mubr.bf16.gmra.mxu0 %v467
        %v1071 = vpop.f32.mrf.mxu0
        %v1072 = vadd.f32 %v875, %v1071
        %v1073 = vpop.f32.mrf.mxu0
        %v1074 = vpop.f32.mrf.mxu0
        %v1075 = vadd.f32 %v875, %v1074
        %v1076 = vpop.f32.mrf.mxu0
        %1077 = vmatprep.mubr.bf16.mxu0 0
        %1078 = vmatmul.mubr.bf16.gmra.mxu0 %v468
        %v1079 = vpop.f32.mrf.mxu0
        %v1080 = vadd.f32 %v875, %v1079
        %v1081 = vpop.f32.mrf.mxu0
        %v1082 = vpop.f32.mrf.mxu0
        %v1083 = vadd.f32 %v875, %v1082
        %v1084 = vpop.f32.mrf.mxu0
        %1085 = vdwg.mxu0
        %v1086 = vpack.c.bf16 %v963, %v960
        %v1087 = vpack.c.bf16 %v971, %v968
        %v1088 = vpack.c.bf16 %v979, %v976
        %v1089 = vpack.c.bf16 %v987, %v984
        %v1090 = vpack.c.bf16 %v995, %v992
        %v1091 = vpack.c.bf16 %v1003, %v1000
        %v1092 = vpack.c.bf16 %v1011, %v1008
        %v1093 = vpack.c.bf16 %v1019, %v1016
        %v1094 = vpack.c.bf16 %v1027, %v1024
        %v1095 = vpack.c.bf16 %v1035, %v1032
        %v1096 = vpack.c.bf16 %v1043, %v1040
        %v1097 = vpack.c.bf16 %v1051, %v1048
        %v1098 = vpack.c.bf16 %v1059, %v1056
        %v1099 = vpack.c.bf16 %v1067, %v1064
        %v1100 = vpack.c.bf16 %v1075, %v1072
        %v1101 = vpack.c.bf16 %v1083, %v1080
        %v1118 = vunpack.c.l.b16 %v1086
        %v1119 = vunpack.c.h.b16 %v1086
        %v1120 = vunpack.c.l.b16 %v1087
        %v1121 = vunpack.c.h.b16 %v1087
        %v1122 = vunpack.c.l.b16 %v1088
        %v1123 = vunpack.c.h.b16 %v1088
        %v1124 = vunpack.c.l.b16 %v1089
        %v1125 = vunpack.c.h.b16 %v1089
        %v1126 = vunpack.c.l.b16 %v1090
        %v1127 = vunpack.c.h.b16 %v1090
        %v1128 = vunpack.c.l.b16 %v1091
        %v1129 = vunpack.c.h.b16 %v1091
        %v1130 = vunpack.c.l.b16 %v1092
        %v1131 = vunpack.c.h.b16 %v1092
        %v1132 = vunpack.c.l.b16 %v1093
        %v1133 = vunpack.c.h.b16 %v1093
        %v1134 = vunpack.c.l.b16 %v1094
        %v1135 = vunpack.c.h.b16 %v1094
        %v1136 = vunpack.c.l.b16 %v1095
        %v1137 = vunpack.c.h.b16 %v1095
        %v1138 = vunpack.c.l.b16 %v1096
        %v1139 = vunpack.c.h.b16 %v1096
        %v1140 = vunpack.c.l.b16 %v1097
        %v1141 = vunpack.c.h.b16 %v1097
        %v1142 = vunpack.c.l.b16 %v1098
        %v1143 = vunpack.c.h.b16 %v1098
        %v1144 = vunpack.c.l.b16 %v1099
        %v1145 = vunpack.c.h.b16 %v1099
        %v1146 = vunpack.c.l.b16 %v1100
        %v1147 = vunpack.c.h.b16 %v1100
        %v1148 = vunpack.c.l.b16 %v1101
        %v1149 = vunpack.c.h.b16 %v1101
        %v1150 = vpack.c.b16 %v1118, %v1118
        %v1151 = vpack.c.b16 %v1119, %v1119
        %v1152 = vpack.c.b16 %v1120, %v1120
        %v1153 = vpack.c.b16 %v1121, %v1121
        %v1154 = vpack.c.b16 %v1122, %v1122
        %v1155 = vpack.c.b16 %v1123, %v1123
        %v1156 = vpack.c.b16 %v1124, %v1124
        %v1157 = vpack.c.b16 %v1125, %v1125
        %v1158 = vpack.c.b16 %v1126, %v1126
        %v1159 = vpack.c.b16 %v1127, %v1127
        %v1160 = vpack.c.b16 %v1128, %v1128
        %v1161 = vpack.c.b16 %v1129, %v1129
        %v1162 = vpack.c.b16 %v1130, %v1130
        %v1163 = vpack.c.b16 %v1131, %v1131
        %v1164 = vpack.c.b16 %v1132, %v1132
        %v1165 = vpack.c.b16 %v1133, %v1133
        %v1166 = vpack.c.b16 %v1134, %v1134
        %v1167 = vpack.c.b16 %v1135, %v1135
        %v1168 = vpack.c.b16 %v1136, %v1136
        %v1169 = vpack.c.b16 %v1137, %v1137
        %v1170 = vpack.c.b16 %v1138, %v1138
        %v1171 = vpack.c.b16 %v1139, %v1139
        %v1172 = vpack.c.b16 %v1140, %v1140
        %v1173 = vpack.c.b16 %v1141, %v1141
        %v1174 = vpack.c.b16 %v1142, %v1142
        %v1175 = vpack.c.b16 %v1143, %v1143
        %v1176 = vpack.c.b16 %v1144, %v1144
        %v1177 = vpack.c.b16 %v1145, %v1145
        %v1178 = vpack.c.b16 %v1146, %v1146
        %v1179 = vpack.c.b16 %v1147, %v1147
        %v1180 = vpack.c.b16 %v1148, %v1148
        %v1181 = vpack.c.b16 %v1149, %v1149
        %1214 = vst [vmem:[%s329] sm:$0xf] %v1150
        %1215 = vst [vmem:[%s329 + $0x4] sm:$0xf] %v1151
        %1216 = vst [vmem:[%s329 + $0x8] sm:$0xf] %v1152
        %1217 = vst [vmem:[%s329 + $0xc] sm:$0xf] %v1153
        %1218 = vst [vmem:[%s329 + $0x10] sm:$0xf] %v1154
        %1219 = vst [vmem:[%s329 + $0x14] sm:$0xf] %v1155
        %1220 = vst [vmem:[%s329 + $0x18] sm:$0xf] %v1156
        %1221 = vst [vmem:[%s329 + $0x1c] sm:$0xf] %v1157
        %1222 = vst [vmem:[%s329 + $0x20] sm:$0xf] %v1158
        %1223 = vst [vmem:[%s329 + $0x24] sm:$0xf] %v1159
        %1224 = vst [vmem:[%s329 + $0x28] sm:$0xf] %v1160
        %1225 = vst [vmem:[%s329 + $0x2c] sm:$0xf] %v1161
        %1226 = vst [vmem:[%s329 + $0x30] sm:$0xf] %v1162
        %1227 = vst [vmem:[%s329 + $0x34] sm:$0xf] %v1163
        %1228 = vst [vmem:[%s329 + $0x38] sm:$0xf] %v1164
        %1229 = vst [vmem:[%s329 + $0x3c] sm:$0xf] %v1165
        %1230 = vst [vmem:[%s329 + $0x40] sm:$0xf] %v1166
        %1231 = vst [vmem:[%s329 + $0x44] sm:$0xf] %v1167
        %1232 = vst [vmem:[%s329 + $0x48] sm:$0xf] %v1168
        %1233 = vst [vmem:[%s329 + $0x4c] sm:$0xf] %v1169
        %1234 = vst [vmem:[%s329 + $0x50] sm:$0xf] %v1170
        %1235 = vst [vmem:[%s329 + $0x54] sm:$0xf] %v1171
        %1236 = vst [vmem:[%s329 + $0x58] sm:$0xf] %v1172
        %1237 = vst [vmem:[%s329 + $0x5c] sm:$0xf] %v1173
        %1238 = vst [vmem:[%s329 + $0x60] sm:$0xf] %v1174
        %1239 = vst [vmem:[%s329 + $0x64] sm:$0xf] %v1175
        %1240 = vst [vmem:[%s329 + $0x68] sm:$0xf] %v1176
        %1241 = vst [vmem:[%s329 + $0x6c] sm:$0xf] %v1177
        %1242 = vst [vmem:[%s329 + $0x70] sm:$0xf] %v1178
        %1243 = vst [vmem:[%s329 + $0x74] sm:$0xf] %v1179
        %1244 = vst [vmem:[%s329 + $0x78] sm:$0xf] %v1180
        %1245 = vst [vmem:[%s329 + $0x7c] sm:$0xf] %v1181
        %s1246 = sand.u32 %s162, 1
        %s1247 = scalar_lea.sflag [#allocation4], %s1246
        %s1248 = sand.u32 %s162, 1
        %s1249 = smul.addr %s1248, 128
        %s1250 = scalar_lea.vmem [#allocation8], %s1249
        %s1251 = sand.u32 %s190, 1
        %s1252 = scalar_lea.sflag [#allocation10], %s1251
        %s1253 = sand.u32 %s190, 1
        %s1254 = smul.addr %s1253, 128
        %s1255 = scalar_lea.vmem [#allocation9], %s1254
        // Predicated region
        $region53: #{tpu_custom_call.1} parent=39 // pred_check
          %p1256 = pneg %p172
        $region54: #{tpu_custom_call.1} parent=39 // pred_check_branch
          %1258 = sbr.rel (%p1256) target = $region56
        $region55: #{tpu_custom_call.1} parent=39 // pred_region
          %s1259 = smul.u32 32, %s33
          %s1261 = ssub.s32 2048, 2048
          %1262 = vsyncadd %s1247, %s1261
          %s1263 = smul.addr %s32, 32
          %s1264 = sadd.s32 %s1259, %s1263
          %s1265 = smul.addr %s1264, 64
          %s1266 = scalar_lea.hbm %s5, %s1265
          %s1267 = sshll.u32 %s1250, 4
          %s1268 = int_to_ptr.vmem [resolvable:$true] %s1267
          %1273 = dma.vmem_to_hbm [thread:$0]  %s1268, 2048, %s1266, %s1247, 64, 64, 4
        $region56: #{tpu_custom_call.1} parent=39 // pred_fallthru
          _
        // Predicated region
        $region57: #{tpu_custom_call.1} parent=39 // pred_check
          %p1274 = pneg %p200
        $region58: #{tpu_custom_call.1} parent=39 // pred_check_branch
          %1276 = sbr.rel (%p1274) target = $region60
        $region59: #{tpu_custom_call.1} parent=39 // pred_region
          %s1277 = smul.u32 32, %s33
          %s1279 = ssub.s32 2048, 2048
          %1280 = vsyncadd %s1252, %s1279
          %s1281 = smul.addr %s32, 32
          %s1282 = sadd.s32 %s1277, %s1281
          %s1283 = smul.addr %s1282, 64
          %s1284 = scalar_lea.hbm %s6, %s1283
          %s1285 = sshll.u32 %s1255, 4
          %s1286 = int_to_ptr.vmem [resolvable:$true] %s1285
          %1291 = dma.vmem_to_hbm [thread:$0]  %s1286, 2048, %s1284, %s1252, 64, 64, 4
        $region60: #{tpu_custom_call.1} parent=39 // pred_fallthru
          _
      $region40: #{tpu_custom_call.1} parent=5 // pred_fallthru
        _
      %p1292 = scmp.le.s32.totalorder 2, %s23
      // Predicated region
      $region61: #{tpu_custom_call.1} parent=5 // pred_check
        %p1293 = pneg %p1292
      $region62: #{tpu_custom_call.1} parent=5 // pred_check_branch
        %1295 = sbr.rel (%p1293) target = $region64
      $region63: #{tpu_custom_call.1} parent=5 // pred_region
        %s1296 = ssub.s32 %s23, 2
        // Predicated region
        $region65: #{tpu_custom_call.1} parent=63 // pred_check
          %p1297 = pneg %p178
        $region66: #{tpu_custom_call.1} parent=63 // pred_check_branch
          %1299 = sbr.rel (%p1297) target = $region68
        $region67: #{tpu_custom_call.1} parent=63 // pred_region
          %s1300 = sand.u32 %s163, 1
          %s1301 = scalar_lea.sflag [#allocation4], %s1300
          %s1302 = sand.u32 %s163, 1
          %s1303 = smul.addr %s1302, 128
          %s1304 = scalar_lea.vmem [#allocation8], %s1303
          %1305 = dma.done %s1301, 2048
        $region68: #{tpu_custom_call.1} parent=63 // pred_fallthru
          _
        // Predicated region
        $region69: #{tpu_custom_call.1} parent=63 // pred_check
          %p1306 = pneg %p206
        $region70: #{tpu_custom_call.1} parent=63 // pred_check_branch
          %1308 = sbr.rel (%p1306) target = $region72
        $region71: #{tpu_custom_call.1} parent=63 // pred_region
          %s1309 = sand.u32 %s191, 1
          %s1310 = scalar_lea.sflag [#allocation10], %s1309
          %s1311 = sand.u32 %s191, 1
          %s1312 = smul.addr %s1311, 128
          %s1313 = scalar_lea.vmem [#allocation9], %s1312
          %1314 = dma.done %s1310, 2048
        $region72: #{tpu_custom_call.1} parent=63 // pred_fallthru
          _
      $region64: #{tpu_custom_call.1} parent=5 // pred_fallthru
        _
    $region6: #{tpu_custom_call.1} parent=1 // loop_footer
      %s27 = sadd.s32 1, %s23
    $region7: #{tpu_custom_call.1} parent=1 // loop_footer_branch
      %22 = sbr.rel target = $region3
    $region8: #{tpu_custom_call.1} parent=1 // loop_exit
      _
    %1315 = vsyncpa [#allocation3], 1
    %s1316 = scalar_lea.sflag [#allocation3], 1
    %1317 = vsyncpa %s1316, 1
    %1318 = vsyncpa [#allocation6], 1
    %1319 = vsyncpa [#allocation4], 1
    %s1320 = scalar_lea.sflag [#allocation4], 1
    %1321 = vsyncpa %s1320, 1
    %1322 = vsyncpa [#allocation10], 1
    %s1323 = scalar_lea.sflag [#allocation10], 1
    %1324 = vsyncpa %s1323, 1

</llo_original>
